<compile_context>
chip_gen: v7x
topology: tpu7x:2x2x1
jax: 0.10.0
libtpu: 0.0.40
codegen_flags: <defaults>
</compile_context>

<pallas_src>
import math
import functools

import jax
import jax.numpy as jnp
from jax.experimental import pallas as pl
from jax.experimental.pallas import tpu as pltpu


def _layer_norm(x, gamma, beta, eps=1e-5):
    # PyTorch LayerNorm: biased variance, eps inside the sqrt.
    mean = jnp.mean(x, axis=-1, keepdims=True)
    var = jnp.mean((x - mean) ** 2, axis=-1, keepdims=True)
    return (x - mean) * jax.lax.rsqrt(var + eps) * gamma + beta


def decoder_layer_kernel(
    x_ref,       # (BB, T, D) f32   block of whole sequences
    wqkv_ref,    # (D, 3D)   bf16   columns grouped [ Q | K | V ]
    wo_ref,      # (D, D)    bf16
    w1_ref,      # (D, F)    bf16
    w2_ref,      # (F, D)    bf16
    vecs_ref,    # (9, D)    f32    rows: bq, bk, bv, bo, b2, g1, be1, g2, be2
    b1_ref,      # (1, F)    f32
    o_ref,       # (BB, T, D) f32
    *, nhead,
):
    BB, T, D = x_ref.shape
    H = nhead
    dk = D // H
    M = BB * T
    G = BB * H
    scale = 1.0 / math.sqrt(dk)
    bf16 = jnp.bfloat16

    x = x_ref[...].reshape(M, D)                     # f32
    xb = x.astype(bf16)

    # ---- fused QKV projection: one (M, D) @ (D, 3D) MXU matmul ----
    qkv = jnp.dot(xb, wqkv_ref[...], preferred_element_type=jnp.float32)   # (M, 3D) f32

    def split_heads(t2d):
        # (M, D) -> (G, T, dk): one relayout per tensor (heads off the lane axis).
        return t2d.reshape(BB, T, H, dk).transpose(0, 2, 1, 3).reshape(G, T, dk)

    # 128-lane-aligned static slices (zero-cost views); bias add in f32.
    q3 = split_heads(qkv[:, 0 * D:1 * D] + vecs_ref[0:1, :]).astype(bf16)
    k3 = split_heads(qkv[:, 1 * D:2 * D] + vecs_ref[1:2, :]).astype(bf16)
    v3 = split_heads(qkv[:, 2 * D:3 * D] + vecs_ref[2:3, :]).astype(bf16)

    # ---- head-batched scaled dot-product attention ----
    s = jnp.einsum("gtd,gsd->gts", q3, k3,
                   preferred_element_type=jnp.float32) * scale             # (G, T, T) f32
    s = s - jnp.max(s, axis=-1, keepdims=True)
    p = jnp.exp(s)
    p = p * pl.reciprocal(jnp.sum(p, axis=-1, keepdims=True), approx=False)
    ctx3 = jnp.einsum("gts,gsd->gtd", p.astype(bf16), v3,
                      preferred_element_type=jnp.float32)                  # (G, T, dk) f32

    # heads back onto the lane axis with a single relayout: (G,T,dk) -> (M, D)
    ctx = ctx3.reshape(BB, H, T, dk).transpose(0, 2, 1, 3).reshape(M, D)

    attn_out = (jnp.dot(ctx.astype(bf16), wo_ref[...],
                        preferred_element_type=jnp.float32) + vecs_ref[3:4, :])

    # ---- residual + LayerNorm 1 ----
    tgt = _layer_norm(x + attn_out, vecs_ref[5:6, :], vecs_ref[6:7, :])

    # ---- feed-forward ----
    h1 = (jnp.dot(tgt.astype(bf16), w1_ref[...],
                  preferred_element_type=jnp.float32) + b1_ref[...])
    h1 = jnp.maximum(h1, 0.0)
    ff = (jnp.dot(h1.astype(bf16), w2_ref[...],
                  preferred_element_type=jnp.float32) + vecs_ref[4:5, :])

    # ---- residual + LayerNorm 2 ----
    out = _layer_norm(tgt + ff, vecs_ref[7:8, :], vecs_ref[8:9, :])
    o_ref[...] = out.reshape(BB, T, D).astype(o_ref.dtype)


def _vmem_limit_bytes(BB, T, D, F, H):
    """Rough per-block VMEM estimate; clamp to 56 MiB (safe on v7x's 64 MiB)."""
    M = BB * T
    weights = 2 * (3 * D * D + D * D + 2 * D * F)       # bf16, single-buffered
    xio = 2 * 2 * M * D * 4                             # x + out, double-buffered f32
    small = 2 * 4 * (16 * D + 8 * F)                    # packed vecs + b1 (padded)
    temps = 4 * (M * 3 * D + 6 * M * D + 2 * BB * H * T * T + 2 * M * F)
    est = weights + xio + small + temps
    return int(max(8 << 20, min(2 * est + (4 << 20), 56 << 20)))


def simple_decoder_layer(x, params, nhead, *, block_batch=None):
    """x: (B, T, D) float32. params: dict of (in, out)-layout f32 weights."""
    B, T, D = x.shape
    F = params["w1"].shape[1]
    bf16 = jnp.bfloat16

    # Each grid block must hold whole sequences (attention mixes across T).
    # Default targets ~256 rows per block (full MXU height on v6e/v7x).
    if block_batch is None:
        block_batch = max(1, min(B, max(1, 256 // T)))
    block_batch = max(1, min(block_batch, B))
    while B % block_batch:
        block_batch -= 1
    BB = block_batch
    grid = (B // BB,)

    # --- host-side (free) packing ---
    wqkv = jnp.concatenate([params["wq"], params["wk"], params["wv"]], axis=1)  # (D, 3D)
    vecs = jnp.concatenate(
        [params["bq"], params["bk"], params["bv"], params["bo"], params["b2"],
         params["g1"], params["be1"], params["g2"], params["be2"]], axis=0)     # (9, D)

    def const(shape):
        # Grid-invariant input: constant index_map, single-buffered.
        return pl.BlockSpec(shape, lambda i: (0,) * len(shape),
                            pipeline_mode=pl.Buffered(1))

    kernel = functools.partial(decoder_layer_kernel, nhead=nhead)
    out = pl.pallas_call(
        kernel,
        out_shape=jax.ShapeDtypeStruct((B, T, D), x.dtype),
        grid_spec=pltpu.PrefetchScalarGridSpec(
            num_scalar_prefetch=0,
            grid=grid,
            in_specs=[
                pl.BlockSpec((BB, T, D), lambda i: (i, 0, 0)),   # x row blocks
                const((D, 3 * D)),                               # wqkv
                const((D, D)),                                   # wo
                const((D, F)),                                   # w1
                const((F, D)),                                   # w2
                const((9, D)),                                   # packed biases / LN
                const((1, F)),                                   # b1
            ],
            out_specs=pl.BlockSpec((BB, T, D), lambda i: (i, 0, 0)),
        ),
        compiler_params=pltpu.CompilerParams(
            dimension_semantics=("parallel",),
            vmem_limit_bytes=_vmem_limit_bytes(BB, T, D, F, nhead),
        ),
    )(
        x,
        wqkv.astype(bf16),
        params["wo"].astype(bf16),
        params["w1"].astype(bf16),
        params["w2"].astype(bf16),
        vecs,
        params["b1"],
    )
    return out


def reference_decoder_layer(x, params, nhead, mxu_dtype=jnp.float32):
    """Pure-JAX reference mirroring the PyTorch forward (eval mode).

    mxu_dtype=jnp.bfloat16 reproduces the kernel's matmul precision (bf16
    operands, f32 accumulation); mxu_dtype=jnp.float32 is the exact f32 path.
    """
    B, T, D = x.shape
    dk = D // nhead

    def mm(a, w):
        return jnp.dot(a.astype(mxu_dtype), w.astype(mxu_dtype),
                       preferred_element_type=jnp.float32)

    def lin(a, w, b):
        return mm(a, w) + b[0]

    q = lin(x, params["wq"], params["bq"]).reshape(B, T, nhead, dk).transpose(0, 2, 1, 3)
    k = lin(x, params["wk"], params["bk"]).reshape(B, T, nhead, dk).transpose(0, 2, 1, 3)
    v = lin(x, params["wv"], params["bv"]).reshape(B, T, nhead, dk).transpose(0, 2, 1, 3)
    scores = jnp.einsum("bhtd,bhsd->bhts", q.astype(mxu_dtype), k.astype(mxu_dtype),
                        preferred_element_type=jnp.float32) / math.sqrt(dk)
    attn = jax.nn.softmax(scores, axis=-1)
    ctx = jnp.einsum("bhts,bhsd->bhtd", attn.astype(mxu_dtype), v.astype(mxu_dtype),
                     preferred_element_type=jnp.float32)
    ctx = ctx.transpose(0, 2, 1, 3).reshape(B, T, D)
    attn_out = lin(ctx, params["wo"], params["bo"])

    def ln(a, g, be, eps=1e-5):
        m = a.mean(-1, keepdims=True)
        var = ((a - m) ** 2).mean(-1, keepdims=True)
        return (a - m) * jax.lax.rsqrt(var + eps) * g[0] + be[0]

    t = ln(x + attn_out, params["g1"], params["be1"])
    h1 = jnp.maximum(lin(t, params["w1"], params["b1"]), 0.0)
    ff = lin(h1, params["w2"], params["b2"])
    return ln(t + ff, params["g2"], params["be2"])


def init_params(key, d_model, dim_feedforward):
    """Deterministic PyTorch-Linear-style init; weights stored as (in, out)."""
    def linear(k, fan_in, fan_out):
        kw, kb = jax.random.split(k)
        bound = 1.0 / math.sqrt(fan_in)
        w = jax.random.uniform(kw, (fan_in, fan_out), jnp.float32, -bound, bound)
        b = jax.random.uniform(kb, (1, fan_out), jnp.float32, -bound, bound)
        return w, b

    keys = jax.random.split(key, 6)
    wq, bq = linear(keys[0], d_model, d_model)
    wk, bk = linear(keys[1], d_model, d_model)
    wv, bv = linear(keys[2], d_model, d_model)
    wo, bo = linear(keys[3], d_model, d_model)
    w1, b1 = linear(keys[4], d_model, dim_feedforward)
    w2, b2 = linear(keys[5], dim_feedforward, d_model)
    return dict(
        wq=wq, bq=bq, wk=wk, bk=bk, wv=wv, bv=bv, wo=wo, bo=bo,
        w1=w1, b1=b1, w2=w2, b2=b2,
        g1=jnp.ones((1, d_model), jnp.float32), be1=jnp.zeros((1, d_model), jnp.float32),
        g2=jnp.ones((1, d_model), jnp.float32), be2=jnp.zeros((1, d_model), jnp.float32),
    )


if __name__ == "__main__":
    # Small shapes consistent with the module: B=2, T=8, d_model=128, nhead=8
    # (d_k=16), dim_feedforward=256.
    B, T, D, H, FF = 2, 8, 128, 8, 256

    key = jax.random.PRNGKey(0)
    k_x, k_p = jax.random.split(key)
    x = jax.random.normal(k_x, (B, T, D), dtype=jnp.float32)
    params = init_params(k_p, D, FF)

    # block_batch=1 exercises the 2-step "parallel" row-block grid at demo
    # shapes; the default picks ~256-row blocks at production sizes.
    out = jax.block_until_ready(simple_decoder_layer(x, params, H, block_batch=1))
    assert out.shape == (B, T, D)

    # Precision-matched reference (bf16 matmul operands, f32 accumulation).
    ref_match = reference_decoder_layer(x, params, H, mxu_dtype=jnp.bfloat16)
    # Exact f32 reference (PyTorch semantics).
    ref_f32 = reference_decoder_layer(x, params, H, mxu_dtype=jnp.float32)

    assert jnp.allclose(out, ref_match, atol=1e-2, rtol=1e-2), \
        f"bf16-matched max abs err {float(jnp.max(jnp.abs(out - ref_match)))}"
    assert jnp.allclose(out, ref_f32, atol=6e-2, rtol=6e-2), \
        f"f32 max abs err {float(jnp.max(jnp.abs(out - ref_f32)))}"
    print("KERNEL_OK")
</pallas_src>

<mosaic_0001>
module attributes {stable_mosaic.version = 11 : i64} {
  func.func @decoder_layer_kernel(%arg0: i32, %arg1: memref<1x8x128xf32, #tpu.memory_space<vmem>>, %arg2: memref<128x384xbf16, #tpu.memory_space<vmem>>, %arg3: memref<128x128xbf16, #tpu.memory_space<vmem>>, %arg4: memref<128x256xbf16, #tpu.memory_space<vmem>>, %arg5: memref<256x128xbf16, #tpu.memory_space<vmem>>, %arg6: memref<9x128xf32, #tpu.memory_space<vmem>>, %arg7: memref<1x256xf32, #tpu.memory_space<vmem>>, %arg8: memref<1x8x128xf32, #tpu.memory_space<vmem>>) attributes {dimension_semantics = [#tpu.dimension_semantics<parallel>], iteration_bounds = array<i64: 2>, scalar_prefetch = 0 : i64, scratch_operands = 0 : i64, tpu.core_type = #tpu.core_type<tc>, window_params = [{transform_indices = @transform_0, window_bounds = array<i64: 1, 8, 128>}, {pipeline_mode = #tpu.pipeline_mode<synchronous>, transform_indices = @transform_1, window_bounds = array<i64: 128, 384>}, {pipeline_mode = #tpu.pipeline_mode<synchronous>, transform_indices = @transform_2, window_bounds = array<i64: 128, 128>}, {pipeline_mode = #tpu.pipeline_mode<synchronous>, transform_indices = @transform_3, window_bounds = array<i64: 128, 256>}, {pipeline_mode = #tpu.pipeline_mode<synchronous>, transform_indices = @transform_4, window_bounds = array<i64: 256, 128>}, {pipeline_mode = #tpu.pipeline_mode<synchronous>, transform_indices = @transform_5, window_bounds = array<i64: 9, 128>}, {pipeline_mode = #tpu.pipeline_mode<synchronous>, transform_indices = @transform_6, window_bounds = array<i64: 1, 256>}, {transform_indices = @transform_7, window_bounds = array<i64: 1, 8, 128>}]} {
    %c0 = arith.constant 0 : index
    %c0_0 = arith.constant 0 : index
    %c0_1 = arith.constant 0 : index
    %0 = vector.load %arg1[%c0, %c0_0, %c0_1] : memref<1x8x128xf32, #tpu.memory_space<vmem>>, vector<1x8x128xf32>
    %1 = vector.shape_cast %0 : vector<1x8x128xf32> to vector<8x128xf32>
    %2 = arith.truncf %1 : vector<8x128xf32> to vector<8x128xbf16>
    %c0_2 = arith.constant 0 : index
    %c0_3 = arith.constant 0 : index
    %3 = vector.load %arg2[%c0_2, %c0_3] : memref<128x384xbf16, #tpu.memory_space<vmem>>, vector<128x384xbf16>
    %cst = arith.constant dense<0.000000e+00> : vector<8x384xf32>
    %4 = tpu.matmul %2, %3, %cst {dimension_numbers = #tpu.dot_dimension_numbers<[1], [0], [0], [1], [0, 0, 1, 1], [], []>} : vector<8x128xbf16>, vector<128x384xbf16>, vector<8x384xf32> -> vector<8x384xf32>
    %5 = vector.extract_strided_slice %4 {offsets = [0, 0], sizes = [8, 128], strides = [1, 1]} : vector<8x384xf32> to vector<8x128xf32>
    %c0_4 = arith.constant 0 : index
    %c0_5 = arith.constant 0 : index
    %6 = vector.load %arg6[%c0_4, %c0_5] : memref<9x128xf32, #tpu.memory_space<vmem>>, vector<1x128xf32>
    %7 = vector.broadcast %6 : vector<1x128xf32> to vector<8x128xf32>
    %8 = arith.addf %5, %7 : vector<8x128xf32>
    %9 = vector.shape_cast %8 : vector<8x128xf32> to vector<1x8x8x16xf32>
    %10 = tpu.transpose %9, [0, 2, 1, 3] : vector<1x8x8x16xf32> -> vector<1x8x8x16xf32>
    %11 = vector.shape_cast %10 : vector<1x8x8x16xf32> to vector<8x8x16xf32>
    %12 = arith.truncf %11 : vector<8x8x16xf32> to vector<8x8x16xbf16>
    %13 = vector.extract_strided_slice %4 {offsets = [0, 128], sizes = [8, 128], strides = [1, 1]} : vector<8x384xf32> to vector<8x128xf32>
    %c1 = arith.constant 1 : index
    %c0_6 = arith.constant 0 : index
    %14 = vector.load %arg6[%c1, %c0_6] : memref<9x128xf32, #tpu.memory_space<vmem>>, vector<1x128xf32>
    %15 = vector.broadcast %14 : vector<1x128xf32> to vector<8x128xf32>
    %16 = arith.addf %13, %15 : vector<8x128xf32>
    %17 = vector.shape_cast %16 : vector<8x128xf32> to vector<1x8x8x16xf32>
    %18 = tpu.transpose %17, [0, 2, 1, 3] : vector<1x8x8x16xf32> -> vector<1x8x8x16xf32>
    %19 = vector.shape_cast %18 : vector<1x8x8x16xf32> to vector<8x8x16xf32>
    %20 = arith.truncf %19 : vector<8x8x16xf32> to vector<8x8x16xbf16>
    %21 = vector.extract_strided_slice %4 {offsets = [0, 256], sizes = [8, 128], strides = [1, 1]} : vector<8x384xf32> to vector<8x128xf32>
    %c2 = arith.constant 2 : index
    %c0_7 = arith.constant 0 : index
    %22 = vector.load %arg6[%c2, %c0_7] : memref<9x128xf32, #tpu.memory_space<vmem>>, vector<1x128xf32>
    %23 = vector.broadcast %22 : vector<1x128xf32> to vector<8x128xf32>
    %24 = arith.addf %21, %23 : vector<8x128xf32>
    %25 = vector.shape_cast %24 : vector<8x128xf32> to vector<1x8x8x16xf32>
    %26 = tpu.transpose %25, [0, 2, 1, 3] : vector<1x8x8x16xf32> -> vector<1x8x8x16xf32>
    %27 = vector.shape_cast %26 : vector<1x8x8x16xf32> to vector<8x8x16xf32>
    %28 = arith.truncf %27 : vector<8x8x16xf32> to vector<8x8x16xbf16>
    "tpu.trace_start"() <{level = 10 : i32, message = "gtd,gsd->gts"}> : () -> ()
    %cst_8 = arith.constant dense<0.000000e+00> : vector<8x8x8xf32>
    %29 = tpu.matmul %12, %20, %cst_8 {dimension_numbers = #tpu.dot_dimension_numbers<[2], [2], [1], [1], [0, 0, 0, 1, 1, 1], [0], [0]>} : vector<8x8x16xbf16>, vector<8x8x16xbf16>, vector<8x8x8xf32> -> vector<8x8x8xf32>
    "tpu.trace_stop"() : () -> ()
    %cst_9 = arith.constant 2.500000e-01 : f32
    %30 = vector.broadcast %cst_9 : f32 to vector<8x8x8xf32>
    %31 = arith.mulf %29, %30 : vector<8x8x8xf32>
    %cst_10 = arith.constant dense<0xFF800000> : vector<8x8xf32>
    %32 = vector.multi_reduction <maximumf>, %31, %cst_10 [2] : vector<8x8x8xf32> to vector<8x8xf32>
    %33 = vector.shape_cast %32 : vector<8x8xf32> to vector<8x8x1xf32>
    %34 = vector.broadcast %33 : vector<8x8x1xf32> to vector<8x8x8xf32>
    %35 = arith.subf %31, %34 : vector<8x8x8xf32>
    %36 = math.exp %35 : vector<8x8x8xf32>
    %cst_11 = arith.constant dense<0.000000e+00> : vector<8x8xf32>
    %37 = vector.multi_reduction <add>, %36, %cst_11 [2] : vector<8x8x8xf32> to vector<8x8xf32>
    %38 = vector.shape_cast %37 : vector<8x8xf32> to vector<8x8x1xf32>
    %39 = tpu.reciprocal %38 : vector<8x8x1xf32> -> vector<8x8x1xf32>
    %40 = vector.broadcast %39 : vector<8x8x1xf32> to vector<8x8x8xf32>
    %41 = arith.mulf %36, %40 : vector<8x8x8xf32>
    %42 = arith.truncf %41 : vector<8x8x8xf32> to vector<8x8x8xbf16>
    "tpu.trace_start"() <{level = 10 : i32, message = "gts,gsd->gtd"}> : () -> ()
    %cst_12 = arith.constant dense<0.000000e+00> : vector<8x8x16xf32>
    %43 = tpu.matmul %42, %28, %cst_12 {dimension_numbers = #tpu.dot_dimension_numbers<[2], [1], [1], [2], [0, 0, 0, 1, 1, 2], [0], [0]>} : vector<8x8x8xbf16>, vector<8x8x16xbf16>, vector<8x8x16xf32> -> vector<8x8x16xf32>
    "tpu.trace_stop"() : () -> ()
    %44 = vector.shape_cast %43 : vector<8x8x16xf32> to vector<1x8x8x16xf32>
    %45 = tpu.transpose %44, [0, 2, 1, 3] : vector<1x8x8x16xf32> -> vector<1x8x8x16xf32>
    %46 = vector.shape_cast %45 : vector<1x8x8x16xf32> to vector<8x128xf32>
    %47 = arith.truncf %46 : vector<8x128xf32> to vector<8x128xbf16>
    %c0_13 = arith.constant 0 : index
    %c0_14 = arith.constant 0 : index
    %48 = vector.load %arg3[%c0_13, %c0_14] : memref<128x128xbf16, #tpu.memory_space<vmem>>, vector<128x128xbf16>
    %cst_15 = arith.constant dense<0.000000e+00> : vector<8x128xf32>
    %49 = tpu.matmul %47, %48, %cst_15 {dimension_numbers = #tpu.dot_dimension_numbers<[1], [0], [0], [1], [0, 0, 1, 1], [], []>} : vector<8x128xbf16>, vector<128x128xbf16>, vector<8x128xf32> -> vector<8x128xf32>
    %c3 = arith.constant 3 : index
    %c0_16 = arith.constant 0 : index
    %50 = vector.load %arg6[%c3, %c0_16] : memref<9x128xf32, #tpu.memory_space<vmem>>, vector<1x128xf32>
    %51 = vector.broadcast %50 : vector<1x128xf32> to vector<8x128xf32>
    %52 = arith.addf %49, %51 : vector<8x128xf32>
    %53 = arith.addf %1, %52 : vector<8x128xf32>
    %c5 = arith.constant 5 : index
    %c0_17 = arith.constant 0 : index
    %54 = vector.load %arg6[%c5, %c0_17] : memref<9x128xf32, #tpu.memory_space<vmem>>, vector<1x128xf32>
    %c6 = arith.constant 6 : index
    %c0_18 = arith.constant 0 : index
    %55 = vector.load %arg6[%c6, %c0_18] : memref<9x128xf32, #tpu.memory_space<vmem>>, vector<1x128xf32>
    %cst_19 = arith.constant dense<0.000000e+00> : vector<8xf32>
    %56 = vector.multi_reduction <add>, %53, %cst_19 [1] : vector<8x128xf32> to vector<8xf32>
    %57 = vector.shape_cast %56 : vector<8xf32> to vector<8x1xf32>
    %cst_20 = arith.constant 1.280000e+02 : f32
    %58 = vector.broadcast %cst_20 : f32 to vector<8x1xf32>
    %59 = arith.divf %57, %58 : vector<8x1xf32>
    %60 = vector.broadcast %59 : vector<8x1xf32> to vector<8x128xf32>
    %61 = arith.subf %53, %60 : vector<8x128xf32>
    %62 = arith.mulf %61, %61 : vector<8x128xf32>
    %cst_21 = arith.constant dense<0.000000e+00> : vector<8xf32>
    %63 = vector.multi_reduction <add>, %62, %cst_21 [1] : vector<8x128xf32> to vector<8xf32>
    %64 = vector.shape_cast %63 : vector<8xf32> to vector<8x1xf32>
    %cst_22 = arith.constant 1.280000e+02 : f32
    %65 = vector.broadcast %cst_22 : f32 to vector<8x1xf32>
    %66 = arith.divf %64, %65 : vector<8x1xf32>
    %67 = vector.broadcast %59 : vector<8x1xf32> to vector<8x128xf32>
    %68 = arith.subf %53, %67 : vector<8x128xf32>
    %cst_23 = arith.constant 9.99999974E-6 : f32
    %69 = vector.broadcast %cst_23 : f32 to vector<8x1xf32>
    %70 = arith.addf %66, %69 : vector<8x1xf32>
    %71 = math.rsqrt %70 : vector<8x1xf32>
    %72 = vector.broadcast %71 : vector<8x1xf32> to vector<8x128xf32>
    %73 = arith.mulf %68, %72 : vector<8x128xf32>
    %74 = vector.broadcast %54 : vector<1x128xf32> to vector<8x128xf32>
    %75 = arith.mulf %73, %74 : vector<8x128xf32>
    %76 = vector.broadcast %55 : vector<1x128xf32> to vector<8x128xf32>
    %77 = arith.addf %75, %76 : vector<8x128xf32>
    %78 = arith.truncf %77 : vector<8x128xf32> to vector<8x128xbf16>
    %c0_24 = arith.constant 0 : index
    %c0_25 = arith.constant 0 : index
    %79 = vector.load %arg4[%c0_24, %c0_25] : memref<128x256xbf16, #tpu.memory_space<vmem>>, vector<128x256xbf16>
    %cst_26 = arith.constant dense<0.000000e+00> : vector<8x256xf32>
    %80 = tpu.matmul %78, %79, %cst_26 {dimension_numbers = #tpu.dot_dimension_numbers<[1], [0], [0], [1], [0, 0, 1, 1], [], []>} : vector<8x128xbf16>, vector<128x256xbf16>, vector<8x256xf32> -> vector<8x256xf32>
    %c0_27 = arith.constant 0 : index
    %c0_28 = arith.constant 0 : index
    %81 = vector.load %arg7[%c0_27, %c0_28] : memref<1x256xf32, #tpu.memory_space<vmem>>, vector<1x256xf32>
    %82 = vector.broadcast %81 : vector<1x256xf32> to vector<8x256xf32>
    %83 = arith.addf %80, %82 : vector<8x256xf32>
    %cst_29 = arith.constant 0.000000e+00 : f32
    %84 = vector.broadcast %cst_29 : f32 to vector<8x256xf32>
    %85 = arith.maximumf %83, %84 : vector<8x256xf32>
    %86 = arith.truncf %85 : vector<8x256xf32> to vector<8x256xbf16>
    %c0_30 = arith.constant 0 : index
    %c0_31 = arith.constant 0 : index
    %87 = vector.load %arg5[%c0_30, %c0_31] : memref<256x128xbf16, #tpu.memory_space<vmem>>, vector<256x128xbf16>
    %cst_32 = arith.constant dense<0.000000e+00> : vector<8x128xf32>
    %88 = tpu.matmul %86, %87, %cst_32 {dimension_numbers = #tpu.dot_dimension_numbers<[1], [0], [0], [1], [0, 0, 1, 1], [], []>} : vector<8x256xbf16>, vector<256x128xbf16>, vector<8x128xf32> -> vector<8x128xf32>
    %c4 = arith.constant 4 : index
    %c0_33 = arith.constant 0 : index
    %89 = vector.load %arg6[%c4, %c0_33] : memref<9x128xf32, #tpu.memory_space<vmem>>, vector<1x128xf32>
    %90 = vector.broadcast %89 : vector<1x128xf32> to vector<8x128xf32>
    %91 = arith.addf %88, %90 : vector<8x128xf32>
    %92 = arith.addf %77, %91 : vector<8x128xf32>
    %c7 = arith.constant 7 : index
    %c0_34 = arith.constant 0 : index
    %93 = vector.load %arg6[%c7, %c0_34] : memref<9x128xf32, #tpu.memory_space<vmem>>, vector<1x128xf32>
    %c8 = arith.constant 8 : index
    %c0_35 = arith.constant 0 : index
    %94 = vector.load %arg6[%c8, %c0_35] : memref<9x128xf32, #tpu.memory_space<vmem>>, vector<1x128xf32>
    %cst_36 = arith.constant dense<0.000000e+00> : vector<8xf32>
    %95 = vector.multi_reduction <add>, %92, %cst_36 [1] : vector<8x128xf32> to vector<8xf32>
    %96 = vector.shape_cast %95 : vector<8xf32> to vector<8x1xf32>
    %cst_37 = arith.constant 1.280000e+02 : f32
    %97 = vector.broadcast %cst_37 : f32 to vector<8x1xf32>
    %98 = arith.divf %96, %97 : vector<8x1xf32>
    %99 = vector.broadcast %98 : vector<8x1xf32> to vector<8x128xf32>
    %100 = arith.subf %92, %99 : vector<8x128xf32>
    %101 = arith.mulf %100, %100 : vector<8x128xf32>
    %cst_38 = arith.constant dense<0.000000e+00> : vector<8xf32>
    %102 = vector.multi_reduction <add>, %101, %cst_38 [1] : vector<8x128xf32> to vector<8xf32>
    %103 = vector.shape_cast %102 : vector<8xf32> to vector<8x1xf32>
    %cst_39 = arith.constant 1.280000e+02 : f32
    %104 = vector.broadcast %cst_39 : f32 to vector<8x1xf32>
    %105 = arith.divf %103, %104 : vector<8x1xf32>
    %106 = vector.broadcast %98 : vector<8x1xf32> to vector<8x128xf32>
    %107 = arith.subf %92, %106 : vector<8x128xf32>
    %cst_40 = arith.constant 9.99999974E-6 : f32
    %108 = vector.broadcast %cst_40 : f32 to vector<8x1xf32>
    %109 = arith.addf %105, %108 : vector<8x1xf32>
    %110 = math.rsqrt %109 : vector<8x1xf32>
    %111 = vector.broadcast %110 : vector<8x1xf32> to vector<8x128xf32>
    %112 = arith.mulf %107, %111 : vector<8x128xf32>
    %113 = vector.broadcast %93 : vector<1x128xf32> to vector<8x128xf32>
    %114 = arith.mulf %112, %113 : vector<8x128xf32>
    %115 = vector.broadcast %94 : vector<1x128xf32> to vector<8x128xf32>
    %116 = arith.addf %114, %115 : vector<8x128xf32>
    %117 = vector.shape_cast %116 : vector<8x128xf32> to vector<1x8x128xf32>
    %c0_41 = arith.constant 0 : index
    %c0_42 = arith.constant 0 : index
    %c0_43 = arith.constant 0 : index
    %118 = vector.load %arg8[%c0_41, %c0_42, %c0_43] : memref<1x8x128xf32, #tpu.memory_space<vmem>>, vector<1x8x128xf32>
    tpu.vector_store %arg8[%c0_41, %c0_42, %c0_43], %117 {strides = array<i32>} : memref<1x8x128xf32, #tpu.memory_space<vmem>>, vector<1x8x128xf32>,
    return
  }
  func.func @transform_0(%arg0: i32) -> (i32, i32, i32) {
    %c0_i32 = arith.constant 0 : i32
    %c0_i32_0 = arith.constant 0 : i32
    %c0_i32_1 = arith.constant 0 : i32
    return %arg0, %c0_i32, %c0_i32_0 : i32, i32, i32
  }
  func.func @transform_1(%arg0: i32) -> (i32, i32) {
    %c0_i32 = arith.constant 0 : i32
    %c0_i32_0 = arith.constant 0 : i32
    %c0_i32_1 = arith.constant 0 : i32
    return %c0_i32, %c0_i32_0 : i32, i32
  }
  func.func @transform_2(%arg0: i32) -> (i32, i32) {
    %c0_i32 = arith.constant 0 : i32
    %c0_i32_0 = arith.constant 0 : i32
    %c0_i32_1 = arith.constant 0 : i32
    return %c0_i32, %c0_i32_0 : i32, i32
  }
  func.func @transform_3(%arg0: i32) -> (i32, i32) {
    %c0_i32 = arith.constant 0 : i32
    %c0_i32_0 = arith.constant 0 : i32
    %c0_i32_1 = arith.constant 0 : i32
    return %c0_i32, %c0_i32_0 : i32, i32
  }
  func.func @transform_4(%arg0: i32) -> (i32, i32) {
    %c0_i32 = arith.constant 0 : i32
    %c0_i32_0 = arith.constant 0 : i32
    %c0_i32_1 = arith.constant 0 : i32
    return %c0_i32, %c0_i32_0 : i32, i32
  }
  func.func @transform_5(%arg0: i32) -> (i32, i32) {
    %c0_i32 = arith.constant 0 : i32
    %c0_i32_0 = arith.constant 0 : i32
    %c0_i32_1 = arith.constant 0 : i32
    return %c0_i32, %c0_i32_0 : i32, i32
  }
  func.func @transform_6(%arg0: i32) -> (i32, i32) {
    %c0_i32 = arith.constant 0 : i32
    %c0_i32_0 = arith.constant 0 : i32
    %c0_i32_1 = arith.constant 0 : i32
    return %c0_i32, %c0_i32_0 : i32, i32
  }
  func.func @transform_7(%arg0: i32) -> (i32, i32, i32) {
    %c0_i32 = arith.constant 0 : i32
    %c0_i32_0 = arith.constant 0 : i32
    %c0_i32_1 = arith.constant 0 : i32
    return %arg0, %c0_i32, %c0_i32_0 : i32, i32, i32
  }
}

</mosaic_0001>

<llo_original>
// kernel: tpu_custom_call.1
$region0: #{tpu_custom_call.1}
  #allocation0 [shape = 'u32[]', space=smem, size = 0x4, offset = 0x4, fixed_abs, tag = 'smem constant byte address 0x4 - core index']
  #allocation1 [shape = 'u32[144,128]{1,0:T(1,128)}', space=vmem, size = 0x12000, scoped, tag = 'internal scratch']
  %s0 = inlined_call_operand.hbm [shape: f32[2,8,128], index: 0, kind: input, shape index: {}]
  %s1 = inlined_call_operand.hbm [shape: bf16[128,384], index: 1, kind: input, shape index: {}]
  %s2 = inlined_call_operand.hbm [shape: bf16[128,128], index: 2, kind: input, shape index: {}]
  %s3 = inlined_call_operand.hbm [shape: bf16[128,256], index: 3, kind: input, shape index: {}]
  %s4 = inlined_call_operand.hbm [shape: bf16[256,128], index: 4, kind: input, shape index: {}]
  %s5 = inlined_call_operand.vmem [shape: f32[9,128], index: 5, kind: input, shape index: {}]
  %s6 = inlined_call_operand.vmem [shape: f32[1,256], index: 6, kind: input, shape index: {}]
  %s7 = inlined_call_operand.hbm [shape: f32[2,8,128], index: 7, kind: output, shape index: {}]
  %s8 = sld [smem:[#allocation0]]
  $region81: #{tpu_custom_call.1} parent=0
    _
  %s10 = ssub.s32 1, %s8
  %s11 = scalar_select 0, %s10, %s8
  $region1: #{tpu_custom_call.1} parent=0
    #allocation2 [shape = 'u8[8192]{0}', space=vmem, size = 0x2000, scoped, tag = 'input window, operand 0']
    #allocation3 [shape = 's32[2]{0}', space=sflag, size = 0x8, scoped, tag = 'scoped memory for tpu_custom_call.1']
    #allocation4 [shape = 's32[2]{0}', space=sflag, size = 0x8, scoped, tag = 'scoped memory for tpu_custom_call.1']
    #allocation5 [shape = 'u8[98304]{0}', space=vmem, size = 0x18000, scoped, tag = 'input window, operand 1, single buffered']
    #allocation6 [shape = 's32[1]{0}', space=sflag, size = 0x4, scoped, tag = 'scoped memory for tpu_custom_call.1']
    #allocation7 [shape = 'u8[32768]{0}', space=vmem, size = 0x8000, scoped, tag = 'input window, operand 2, single buffered']
    #allocation8 [shape = 'u8[65536]{0}', space=vmem, size = 0x10000, scoped, tag = 'input window, operand 3, single buffered']
    #allocation9 [shape = 's32[1]{0}', space=sflag, size = 0x4, scoped, tag = 'scoped memory for tpu_custom_call.1']
    #allocation10 [shape = 'u8[65536]{0}', space=vmem, size = 0x10000, scoped, tag = 'input window, operand 4, single buffered']
    #allocation11 [shape = 'u8[8192]{0}', space=vmem, size = 0x2000, scoped, tag = 'output window, operand 0']
    %12 = vsyncpa [#allocation3], 0
    %s13 = scalar_lea.sflag [#allocation3], 1
    %14 = vsyncpa %s13, 0
    %15 = vsyncpa [#allocation6], 0
    %16 = vsyncpa [#allocation9], 0
    %17 = vsyncpa [#allocation4], 0
    %s18 = scalar_lea.sflag [#allocation4], 1
    %19 = vsyncpa %s18, 0
    loop: start=0, step=1, limit=4
    $region2: #{tpu_custom_call.1} parent=1 // loop_pre_header
      _
    $region3: #{tpu_custom_call.1} parent=1 // loop_header
      %s21 = sphi 0, %s25
      %p22 = scmp.ge.s32.totalorder %s21, 4
      %s31 = sphi 0, %s33
      %s34 = sphi 0, %s31
      %s35 = sphi 0, %s34
      %s51 = sphi 0, %s35
      %s55 = sphi 0, %s55
      %s57 = sphi 0, %s55
      %s58 = sphi 0, %s57
      %s72 = sphi 0, %s58
      %s76 = sphi 0, %s76
      %s78 = sphi 0, %s76
      %s79 = sphi 0, %s78
      %s93 = sphi 0, %s79
      %s97 = sphi 0, %s97
      %s99 = sphi 0, %s97
      %s100 = sphi 0, %s99
      %s114 = sphi 0, %s100
      %s118 = sphi 0, %s118
      %s120 = sphi 0, %s118
      %s121 = sphi 0, %s120
      %s135 = sphi 0, %s121
      %s139 = sphi 0, %s139
      %s141 = sphi 0, %s139
      %s142 = sphi 0, %s141
      %s156 = sphi 0, %s142
      %s160 = sphi 0, %s160
      %s162 = sphi 0, %s160
      %s163 = sphi 0, %s162
      %s177 = sphi 0, %s163
      %s183 = sphi 0, %s185
      %s186 = sphi 0, %s183
      %s187 = sphi 0, %s186
      %s203 = sphi 0, %s187
    $region4: #{tpu_custom_call.1} parent=1 // loop_header_branch
      %24 = sbr.rel (%p22) target = $region8
    $region5: #{tpu_custom_call.1} parent=1 // loop_body
      %s26 = ssub.s32 %s21, 1
      %s27 = ssub.s32 %s21, 2
      %s28 = sadd.s32 %s21, 1
      %s29 = ssub.s32 %s21, %s28
      %p30 = scmp.eq.s32.totalorder %s29, 0
      %s32 = sadd.s32 %s31, 1
      %s33 = scalar_select %p30, %s31, %s32
      %p36 = pneg %p30
      %p37 = scmp.eq.s32.totalorder %s21, 1
      %p38 = por %p36, %p37
      %p39 = scmp.ne.s32.totalorder %s31, %s34
      %p40 = scmp.eq.s32.totalorder %s21, 0
      %p41 = por %p39, %p40
      %p42 = scmp.ne.s32.totalorder %s31, %s34
      %p43 = scmp.eq.s32.totalorder %s26, 1
      %p44 = por %p42, %p43
      %p45 = scmp.ne.s32.totalorder %s34, %s35
      %p46 = scmp.eq.s32.totalorder %s26, 0
      %p47 = por %p45, %p46
      %p48 = scmp.ne.s32.totalorder %s34, %s35
      %p49 = scmp.eq.s32.totalorder %s27, 1
      %p50 = por %p48, %p49
      %p52 = scmp.ne.s32.totalorder %s35, %s51
      %p53 = scmp.eq.s32.totalorder %s27, 0
      %p54 = por %p52, %p53
      %s56 = sadd.s32 %s55, 1
      %p59 = scmp.eq.s32.totalorder %s21, 1
      %p60 = scmp.ne.s32.totalorder %s55, %s57
      %p61 = scmp.eq.s32.totalorder %s21, 0
      %p62 = por %p60, %p61
      %p63 = scmp.ne.s32.totalorder %s55, %s57
      %p64 = scmp.eq.s32.totalorder %s26, 1
      %p65 = por %p63, %p64
      %p66 = scmp.ne.s32.totalorder %s57, %s58
      %p67 = scmp.eq.s32.totalorder %s26, 0
      %p68 = por %p66, %p67
      %p69 = scmp.ne.s32.totalorder %s57, %s58
      %p70 = scmp.eq.s32.totalorder %s27, 1
      %p71 = por %p69, %p70
      %p73 = scmp.ne.s32.totalorder %s58, %s72
      %p74 = scmp.eq.s32.totalorder %s27, 0
      %p75 = por %p73, %p74
      %s77 = sadd.s32 %s76, 1
      %p80 = scmp.eq.s32.totalorder %s21, 1
      %p81 = scmp.ne.s32.totalorder %s76, %s78
      %p82 = scmp.eq.s32.totalorder %s21, 0
      %p83 = por %p81, %p82
      %p84 = scmp.ne.s32.totalorder %s76, %s78
      %p85 = scmp.eq.s32.totalorder %s26, 1
      %p86 = por %p84, %p85
      %p87 = scmp.ne.s32.totalorder %s78, %s79
      %p88 = scmp.eq.s32.totalorder %s26, 0
      %p89 = por %p87, %p88
      %p90 = scmp.ne.s32.totalorder %s78, %s79
      %p91 = scmp.eq.s32.totalorder %s27, 1
      %p92 = por %p90, %p91
      %p94 = scmp.ne.s32.totalorder %s79, %s93
      %p95 = scmp.eq.s32.totalorder %s27, 0
      %p96 = por %p94, %p95
      %s98 = sadd.s32 %s97, 1
      %p101 = scmp.eq.s32.totalorder %s21, 1
      %p102 = scmp.ne.s32.totalorder %s97, %s99
      %p103 = scmp.eq.s32.totalorder %s21, 0
      %p104 = por %p102, %p103
      %p105 = scmp.ne.s32.totalorder %s97, %s99
      %p106 = scmp.eq.s32.totalorder %s26, 1
      %p107 = por %p105, %p106
      %p108 = scmp.ne.s32.totalorder %s99, %s100
      %p109 = scmp.eq.s32.totalorder %s26, 0
      %p110 = por %p108, %p109
      %p111 = scmp.ne.s32.totalorder %s99, %s100
      %p112 = scmp.eq.s32.totalorder %s27, 1
      %p113 = por %p111, %p112
      %p115 = scmp.ne.s32.totalorder %s100, %s114
      %p116 = scmp.eq.s32.totalorder %s27, 0
      %p117 = por %p115, %p116
      %s119 = sadd.s32 %s118, 1
      %p122 = scmp.eq.s32.totalorder %s21, 1
      %p123 = scmp.ne.s32.totalorder %s118, %s120
      %p124 = scmp.eq.s32.totalorder %s21, 0
      %p125 = por %p123, %p124
      %p126 = scmp.ne.s32.totalorder %s118, %s120
      %p127 = scmp.eq.s32.totalorder %s26, 1
      %p128 = por %p126, %p127
      %p129 = scmp.ne.s32.totalorder %s120, %s121
      %p130 = scmp.eq.s32.totalorder %s26, 0
      %p131 = por %p129, %p130
      %p132 = scmp.ne.s32.totalorder %s120, %s121
      %p133 = scmp.eq.s32.totalorder %s27, 1
      %p134 = por %p132, %p133
      %p136 = scmp.ne.s32.totalorder %s121, %s135
      %p137 = scmp.eq.s32.totalorder %s27, 0
      %p138 = por %p136, %p137
      %s140 = sadd.s32 %s139, 1
      %p143 = scmp.eq.s32.totalorder %s21, 1
      %p144 = scmp.ne.s32.totalorder %s139, %s141
      %p145 = scmp.eq.s32.totalorder %s21, 0
      %p146 = por %p144, %p145
      %p147 = scmp.ne.s32.totalorder %s139, %s141
      %p148 = scmp.eq.s32.totalorder %s26, 1
      %p149 = por %p147, %p148
      %p150 = scmp.ne.s32.totalorder %s141, %s142
      %p151 = scmp.eq.s32.totalorder %s26, 0
      %p152 = por %p150, %p151
      %p153 = scmp.ne.s32.totalorder %s141, %s142
      %p154 = scmp.eq.s32.totalorder %s27, 1
      %p155 = por %p153, %p154
      %p157 = scmp.ne.s32.totalorder %s142, %s156
      %p158 = scmp.eq.s32.totalorder %s27, 0
      %p159 = por %p157, %p158
      %s161 = sadd.s32 %s160, 1
      %p164 = scmp.eq.s32.totalorder %s21, 1
      %p165 = scmp.ne.s32.totalorder %s160, %s162
      %p166 = scmp.eq.s32.totalorder %s21, 0
      %p167 = por %p165, %p166
      %p168 = scmp.ne.s32.totalorder %s160, %s162
      %p169 = scmp.eq.s32.totalorder %s26, 1
      %p170 = por %p168, %p169
      %p171 = scmp.ne.s32.totalorder %s162, %s163
      %p172 = scmp.eq.s32.totalorder %s26, 0
      %p173 = por %p171, %p172
      %p174 = scmp.ne.s32.totalorder %s162, %s163
      %p175 = scmp.eq.s32.totalorder %s27, 1
      %p176 = por %p174, %p175
      %p178 = scmp.ne.s32.totalorder %s163, %s177
      %p179 = scmp.eq.s32.totalorder %s27, 0
      %p180 = por %p178, %p179
      %s181 = ssub.s32 %s21, %s28
      %p182 = scmp.eq.s32.totalorder %s181, 0
      %s184 = sadd.s32 %s183, 1
      %s185 = scalar_select %p182, %s183, %s184
      %p188 = pneg %p182
      %p189 = scmp.eq.s32.totalorder %s21, 1
      %p190 = por %p188, %p189
      %p191 = scmp.ne.s32.totalorder %s183, %s186
      %p192 = scmp.eq.s32.totalorder %s21, 0
      %p193 = por %p191, %p192
      %p194 = scmp.ne.s32.totalorder %s183, %s186
      %p195 = scmp.eq.s32.totalorder %s26, 1
      %p196 = por %p194, %p195
      %p197 = scmp.ne.s32.totalorder %s186, %s187
      %p198 = scmp.eq.s32.totalorder %s26, 0
      %p199 = por %p197, %p198
      %p200 = scmp.ne.s32.totalorder %s186, %s187
      %p201 = scmp.eq.s32.totalorder %s27, 1
      %p202 = por %p200, %p201
      %p204 = scmp.ne.s32.totalorder %s187, %s203
      %p205 = scmp.eq.s32.totalorder %s27, 0
      %p206 = por %p204, %p205
      %p207 = scmp.le.s32.totalorder 1, %s21
      %p208 = scmp.lt.s32.totalorder %s21, 3
      %p209 = pnand %p207, %p208
      %p210 = pneg %p209
      // Predicated region
      $region9: #{tpu_custom_call.1} parent=5 // pred_check
        _
      $region10: #{tpu_custom_call.1} parent=5 // pred_check_branch
        %212 = sbr.rel (%p209) target = $region12
      $region11: #{tpu_custom_call.1} parent=5 // pred_region
        %s213 = ssub.s32 %s21, 1
        // Predicated region
        $region13: #{tpu_custom_call.1} parent=11 // pred_check
          %p214 = pneg %p68
        $region14: #{tpu_custom_call.1} parent=11 // pred_check_branch
          %216 = sbr.rel (%p214) target = $region16
        $region15: #{tpu_custom_call.1} parent=11 // pred_region
          %s218 = ssub.s32 3072, 3072
          %219 = vsyncadd [#allocation6], %s218
          %s220 = sshll.u32 [#allocation5], 4
          %s221 = int_to_ptr.vmem [resolvable:$true] %s220
          %226 = dma.hbm_to_vmem [thread:$0]  %s1, 3072, %s221, [#allocation6], 192, 192, 12
        $region16: #{tpu_custom_call.1} parent=11 // pred_fallthru
          _
        // Predicated region
        $region17: #{tpu_custom_call.1} parent=11 // pred_check
          %p227 = pneg %p89
        $region18: #{tpu_custom_call.1} parent=11 // pred_check_branch
          %229 = sbr.rel (%p227) target = $region20
        $region19: #{tpu_custom_call.1} parent=11 // pred_region
          %s231 = ssub.s32 1024, 1024
          %232 = vsyncadd [#allocation6], %s231
          %s233 = sshll.u32 [#allocation7], 4
          %s234 = int_to_ptr.vmem [resolvable:$true] %s233
          %239 = dma.hbm_to_vmem [thread:$0]  %s2, 1024, %s234, [#allocation6], 64, 64, 4
        $region20: #{tpu_custom_call.1} parent=11 // pred_fallthru
          _
        // Predicated region
        $region21: #{tpu_custom_call.1} parent=11 // pred_check
          %p240 = pneg %p110
        $region22: #{tpu_custom_call.1} parent=11 // pred_check_branch
          %242 = sbr.rel (%p240) target = $region24
        $region23: #{tpu_custom_call.1} parent=11 // pred_region
          %s244 = ssub.s32 2048, 2048
          %245 = vsyncadd [#allocation9], %s244
          %s246 = sshll.u32 [#allocation8], 4
          %s247 = int_to_ptr.vmem [resolvable:$true] %s246
          %252 = dma.hbm_to_vmem [thread:$0]  %s3, 2048, %s247, [#allocation9], 128, 128, 8
        $region24: #{tpu_custom_call.1} parent=11 // pred_fallthru
          _
        // Predicated region
        $region25: #{tpu_custom_call.1} parent=11 // pred_check
          %p253 = pneg %p131
        $region26: #{tpu_custom_call.1} parent=11 // pred_check_branch
          %255 = sbr.rel (%p253) target = $region28
        $region27: #{tpu_custom_call.1} parent=11 // pred_region
          %s257 = ssub.s32 2048, 2048
          %258 = vsyncadd [#allocation9], %s257
          %s259 = sshll.u32 [#allocation10], 4
          %s260 = int_to_ptr.vmem [resolvable:$true] %s259
          %265 = dma.hbm_to_vmem [thread:$0]  %s4, 2048, %s260, [#allocation9], 64, 64, 4
        $region28: #{tpu_custom_call.1} parent=11 // pred_fallthru
          _
        // Predicated region
        $region29: #{tpu_custom_call.1} parent=11 // pred_check
          %p266 = pneg %p152
        $region30: #{tpu_custom_call.1} parent=11 // pred_check_branch
          %268 = sbr.rel (%p266) target = $region32
        $region31: #{tpu_custom_call.1} parent=11 // pred_region
          _
        $region32: #{tpu_custom_call.1} parent=11 // pred_fallthru
          _
        // Predicated region
        $region33: #{tpu_custom_call.1} parent=11 // pred_check
          %p269 = pneg %p173
        $region34: #{tpu_custom_call.1} parent=11 // pred_check_branch
          %271 = sbr.rel (%p269) target = $region36
        $region35: #{tpu_custom_call.1} parent=11 // pred_region
          _
        $region36: #{tpu_custom_call.1} parent=11 // pred_fallthru
          _
      $region12: #{tpu_custom_call.1} parent=5 // pred_fallthru
        _
      %p272 = scmp.lt.s32.totalorder %s21, 2
      // Predicated region
      $region37: #{tpu_custom_call.1} parent=5 // pred_check
        %p273 = pneg %p272
      $region38: #{tpu_custom_call.1} parent=5 // pred_check_branch
        %275 = sbr.rel (%p273) target = $region40
      $region39: #{tpu_custom_call.1} parent=5 // pred_region
        // Predicated region
        $region41: #{tpu_custom_call.1} parent=39 // pred_check
          %p276 = pneg %p41
        $region42: #{tpu_custom_call.1} parent=39 // pred_check_branch
          %278 = sbr.rel (%p276) target = $region44
        $region43: #{tpu_custom_call.1} parent=39 // pred_region
          %s279 = sand.u32 %s31, 1
          %s280 = scalar_lea.sflag [#allocation3], %s279
          %s281 = sand.u32 %s31, 1
          %s282 = smul.addr %s281, 8
          %s283 = scalar_lea.vmem [#allocation2], %s282
          %s285 = ssub.s32 128, 128
          %286 = vsyncadd %s280, %s285
          %s287 = smul.addr %s21, 128
          %s288 = scalar_lea.hbm %s0, %s287
          %s290 = sshll.u32 %s283, 4
          %s291 = int_to_ptr.vmem [resolvable:$true] %s290
          %293 = dma.hbm_to_vmem [thread:$0]  %s288, 128, %s291, %s280
        $region44: #{tpu_custom_call.1} parent=39 // pred_fallthru
          _
      $region40: #{tpu_custom_call.1} parent=5 // pred_fallthru
        _
      %p294 = scmp.le.s32.totalorder 1, %s21
      %p295 = scmp.lt.s32.totalorder %s21, 3
      %p296 = pnand %p294, %p295
      %p297 = pneg %p296
      // Predicated region
      $region45: #{tpu_custom_call.1} parent=5 // pred_check
        _
      $region46: #{tpu_custom_call.1} parent=5 // pred_check_branch
        %299 = sbr.rel (%p296) target = $region48
      $region47: #{tpu_custom_call.1} parent=5 // pred_region
        %s300 = ssub.s32 %s21, 1
        %s301 = sand.u32 %s34, 1
        %s302 = scalar_lea.sflag [#allocation3], %s301
        %s303 = sand.u32 %s34, 1
        %s304 = smul.addr %s303, 8
        %s305 = scalar_lea.vmem [#allocation2], %s304
        // Predicated region
        $region49: #{tpu_custom_call.1} parent=47 // pred_check
          %p306 = pneg %p47
        $region50: #{tpu_custom_call.1} parent=47 // pred_check_branch
          %308 = sbr.rel (%p306) target = $region52
        $region51: #{tpu_custom_call.1} parent=47 // pred_region
          %309 = dma.done %s302, 128
        $region52: #{tpu_custom_call.1} parent=47 // pred_fallthru
          _
        // Predicated region
        $region53: #{tpu_custom_call.1} parent=47 // pred_check
          %p310 = pneg %p68
        $region54: #{tpu_custom_call.1} parent=47 // pred_check_branch
          %312 = sbr.rel (%p310) target = $region56
        $region55: #{tpu_custom_call.1} parent=47 // pred_region
          %313 = dma.done [#allocation6], 3072
        $region56: #{tpu_custom_call.1} parent=47 // pred_fallthru
          _
        // Predicated region
        $region57: #{tpu_custom_call.1} parent=47 // pred_check
          %p314 = pneg %p89
        $region58: #{tpu_custom_call.1} parent=47 // pred_check_branch
          %316 = sbr.rel (%p314) target = $region60
        $region59: #{tpu_custom_call.1} parent=47 // pred_region
          %317 = dma.done [#allocation6], 1024
        $region60: #{tpu_custom_call.1} parent=47 // pred_fallthru
          _
        // Predicated region
        $region61: #{tpu_custom_call.1} parent=47 // pred_check
          %p318 = pneg %p110
        $region62: #{tpu_custom_call.1} parent=47 // pred_check_branch
          %320 = sbr.rel (%p318) target = $region64
        $region63: #{tpu_custom_call.1} parent=47 // pred_region
          %321 = dma.done [#allocation9], 2048
        $region64: #{tpu_custom_call.1} parent=47 // pred_fallthru
          _
        // Predicated region
        $region65: #{tpu_custom_call.1} parent=47 // pred_check
          %p322 = pneg %p131
        $region66: #{tpu_custom_call.1} parent=47 // pred_check_branch
          %324 = sbr.rel (%p322) target = $region68
        $region67: #{tpu_custom_call.1} parent=47 // pred_region
          %325 = dma.done [#allocation9], 2048
        $region68: #{tpu_custom_call.1} parent=47 // pred_fallthru
          _
        %s326 = sand.u32 %s34, 1
        %s327 = scalar_lea.sflag [#allocation3], %s326
        %s328 = sand.u32 %s34, 1
        %s329 = smul.addr %s328, 8
        %s330 = scalar_lea.vmem [#allocation2], %s329
        %p331 = pneg %p47
        %p332 = pneg %p44
        %p333 = pneg %p68
        %p334 = pneg %p65
        %p335 = pneg %p89
        %p336 = pneg %p86
        %p337 = pneg %p110
        %p338 = pneg %p107
        %p339 = pneg %p131
        %p340 = pneg %p128
        %p341 = pneg %p152
        %p342 = pneg %p149
        %p343 = pneg %p173
        %p344 = pneg %p170
        %p345 = pneg %p199
        %p346 = pneg %p196
        %s347 = sand.u32 %s186, 1
        %s348 = scalar_lea.sflag [#allocation4], %s347
        %s349 = sand.u32 %s186, 1
        %s350 = smul.addr %s349, 8
        %s351 = scalar_lea.vmem [#allocation11], %s350
        %v353 = vld [vmem:[%s305] sm:$0xff]
        %v354 = vpack.c.bf16 %v353, %v353
        %v355 = vld [vmem:[#allocation5] sm:$0xff]
        %v356 = vld [vmem:[#allocation5 + $0x8] sm:$0xf]
        %v357 = vld [vmem:[#allocation5 + $0xc] sm:$0xff]
        %v358 = vld [vmem:[#allocation5 + $0x14] sm:$0xf]
        %v359 = vld [vmem:[#allocation5 + $0x18] sm:$0xff]
        %v360 = vld [vmem:[#allocation5 + $0x20] sm:$0xf]
        %v361 = vld [vmem:[#allocation5 + $0x24] sm:$0xff]
        %v362 = vld [vmem:[#allocation5 + $0x2c] sm:$0xf]
        %v363 = vld [vmem:[#allocation5 + $0x30] sm:$0xff]
        %v364 = vld [vmem:[#allocation5 + $0x38] sm:$0xf]
        %v365 = vld [vmem:[#allocation5 + $0x3c] sm:$0xff]
        %v366 = vld [vmem:[#allocation5 + $0x44] sm:$0xf]
        %v367 = vld [vmem:[#allocation5 + $0x48] sm:$0xff]
        %v368 = vld [vmem:[#allocation5 + $0x50] sm:$0xf]
        %v369 = vld [vmem:[#allocation5 + $0x54] sm:$0xff]
        %v370 = vld [vmem:[#allocation5 + $0x5c] sm:$0xf]
        %v371 = vld [vmem:[#allocation5 + $0x60] sm:$0xff]
        %v372 = vld [vmem:[#allocation5 + $0x68] sm:$0xf]
        %v373 = vld [vmem:[#allocation5 + $0x6c] sm:$0xff]
        %v374 = vld [vmem:[#allocation5 + $0x74] sm:$0xf]
        %v375 = vld [vmem:[#allocation5 + $0x78] sm:$0xff]
        %v376 = vld [vmem:[#allocation5 + $0x80] sm:$0xf]
        %v377 = vld [vmem:[#allocation5 + $0x84] sm:$0xff]
        %v378 = vld [vmem:[#allocation5 + $0x8c] sm:$0xf]
        %v379 = vld [vmem:[#allocation5 + $0x90] sm:$0xff]
        %v380 = vld [vmem:[#allocation5 + $0x98] sm:$0xf]
        %v381 = vld [vmem:[#allocation5 + $0x9c] sm:$0xff]
        %v382 = vld [vmem:[#allocation5 + $0xa4] sm:$0xf]
        %v383 = vld [vmem:[#allocation5 + $0xa8] sm:$0xff]
        %v384 = vld [vmem:[#allocation5 + $0xb0] sm:$0xf]
        %v385 = vld [vmem:[#allocation5 + $0xb4] sm:$0xff]
        %v386 = vld [vmem:[#allocation5 + $0xbc] sm:$0xf]
        %v419 = vunpack.c.l.b16 %v355
        %v420 = vunpack.c.h.b16 %v355
        %v421 = vunpack.c.l.b16 %v356
        %v422 = vunpack.c.l.b16 %v357
        %v423 = vunpack.c.h.b16 %v357
        %v424 = vunpack.c.l.b16 %v358
        %v425 = vunpack.c.l.b16 %v359
        %v426 = vunpack.c.h.b16 %v359
        %v427 = vunpack.c.l.b16 %v360
        %v428 = vunpack.c.l.b16 %v361
        %v429 = vunpack.c.h.b16 %v361
        %v430 = vunpack.c.l.b16 %v362
        %v431 = vunpack.c.l.b16 %v363
        %v432 = vunpack.c.h.b16 %v363
        %v433 = vunpack.c.l.b16 %v364
        %v434 = vunpack.c.l.b16 %v365
        %v435 = vunpack.c.h.b16 %v365
        %v436 = vunpack.c.l.b16 %v366
        %v437 = vunpack.c.l.b16 %v367
        %v438 = vunpack.c.h.b16 %v367
        %v439 = vunpack.c.l.b16 %v368
        %v440 = vunpack.c.l.b16 %v369
        %v441 = vunpack.c.h.b16 %v369
        %v442 = vunpack.c.l.b16 %v370
        %v443 = vunpack.c.l.b16 %v371
        %v444 = vunpack.c.h.b16 %v371
        %v445 = vunpack.c.l.b16 %v372
        %v446 = vunpack.c.l.b16 %v373
        %v447 = vunpack.c.h.b16 %v373
        %v448 = vunpack.c.l.b16 %v374
        %v449 = vunpack.c.l.b16 %v375
        %v450 = vunpack.c.h.b16 %v375
        %v451 = vunpack.c.l.b16 %v376
        %v452 = vunpack.c.l.b16 %v377
        %v453 = vunpack.c.h.b16 %v377
        %v454 = vunpack.c.l.b16 %v378
        %v455 = vunpack.c.l.b16 %v379
        %v456 = vunpack.c.h.b16 %v379
        %v457 = vunpack.c.l.b16 %v380
        %v458 = vunpack.c.l.b16 %v381
        %v459 = vunpack.c.h.b16 %v381
        %v460 = vunpack.c.l.b16 %v382
        %v461 = vunpack.c.l.b16 %v383
        %v462 = vunpack.c.h.b16 %v383
        %v463 = vunpack.c.l.b16 %v384
        %v464 = vunpack.c.l.b16 %v385
        %v465 = vunpack.c.h.b16 %v385
        %v466 = vunpack.c.l.b16 %v386
        %v467 = vpack.c.b16 %v422, %v419
        %v468 = vpack.c.b16 %v423, %v420
        %v469 = vpack.c.b16 %v424, %v421
        %v470 = vpack.c.b16 %v428, %v425
        %v471 = vpack.c.b16 %v429, %v426
        %v472 = vpack.c.b16 %v430, %v427
        %v473 = vpack.c.b16 %v434, %v431
        %v474 = vpack.c.b16 %v435, %v432
        %v475 = vpack.c.b16 %v436, %v433
        %v476 = vpack.c.b16 %v440, %v437
        %v477 = vpack.c.b16 %v441, %v438
        %v478 = vpack.c.b16 %v442, %v439
        %v479 = vpack.c.b16 %v446, %v443
        %v480 = vpack.c.b16 %v447, %v444
        %v481 = vpack.c.b16 %v448, %v445
        %v482 = vpack.c.b16 %v452, %v449
        %v483 = vpack.c.b16 %v453, %v450
        %v484 = vpack.c.b16 %v454, %v451
        %v485 = vpack.c.b16 %v458, %v455
        %v486 = vpack.c.b16 %v459, %v456
        %v487 = vpack.c.b16 %v460, %v457
        %v488 = vpack.c.b16 %v464, %v461
        %v489 = vpack.c.b16 %v465, %v462
        %v490 = vpack.c.b16 %v466, %v463
        %515 = vmatprep.subr.bf16.mxu0 %v468
        %516 = vmatpush1.bf16.msra.mxu0 %v467
        %517 = vmatprep.subr.bf16.mxu0 %v471
        %518 = vmatpush1.bf16.msra.mxu0 %v470
        %519 = vmatprep.subr.bf16.mxu0 %v474
        %520 = vmatpush1.bf16.msra.mxu0 %v473
        %521 = vmatprep.subr.bf16.mxu0 %v477
        %522 = vmatpush1.bf16.msra.mxu0 %v476
        %523 = vmatprep.subr.bf16.mxu0 %v480
        %524 = vmatpush1.bf16.msra.mxu0 %v479
        %525 = vmatprep.subr.bf16.mxu0 %v483
        %526 = vmatpush1.bf16.msra.mxu0 %v482
        %527 = vmatprep.subr.bf16.mxu0 %v486
        %528 = vmatpush1.bf16.msra.mxu0 %v485
        %529 = vmatprep.subr.bf16.mxu0 %v489
        %530 = vmatpush1.bf16.msra.mxu0 %v488
        %531 = vmatprep.subr.bf16.mxu0 0
        %532 = vmatpush1.bf16.msra.mxu0 0
        %533 = vmatprep.subr.bf16.mxu0 0
        %534 = vmatpush1.bf16.msra.mxu0 0
        %535 = vmatprep.subr.bf16.mxu0 0
        %536 = vmatpush1.bf16.msra.mxu0 0
        %537 = vmatprep.subr.bf16.mxu0 0
        %538 = vmatpush1.bf16.msra.mxu0 0
        %539 = vmatprep.subr.bf16.mxu0 0
        %540 = vmatpush1.bf16.msra.mxu0 0
        %541 = vmatprep.subr.bf16.mxu0 0
        %542 = vmatpush1.bf16.msra.mxu0 0
        %543 = vmatprep.subr.bf16.mxu0 0
        %544 = vmatpush1.bf16.msra.mxu0 0
        %545 = vmatprep.subr.bf16.mxu0 0
        %546 = vmatpush1.bf16.msra.mxu0 0
        %547 = vmatprep.mubr.bf16.mxu0 0
        %548 = vmatmul.mubr.bf16.gmra.mrb[0].mxu0 %v354
        %v549 = vpop.f32.mrb[0].mxu0
        %v550 = vadd.f32 0.0, %v549
        %v551 = vpop.f32.mrb[0].mxu0
        %v552 = vadd.f32 0.0, %v551
        %v553 = vpop.f32.mrb[0].mxu0
        %v554 = vpop.f32.mrb[0].mxu0
        %555 = vdwg.mxu0
        %556 = vmatprep.subr.bf16.mxu0 0
        %557 = vmatpush1.bf16.msra.mxu0 %v469
        %558 = vmatprep.subr.bf16.mxu0 0
        %559 = vmatpush1.bf16.msra.mxu0 %v472
        %560 = vmatprep.subr.bf16.mxu0 0
        %561 = vmatpush1.bf16.msra.mxu0 %v475
        %562 = vmatprep.subr.bf16.mxu0 0
        %563 = vmatpush1.bf16.msra.mxu0 %v478
        %564 = vmatprep.subr.bf16.mxu0 0
        %565 = vmatpush1.bf16.msra.mxu0 %v481
        %566 = vmatprep.subr.bf16.mxu0 0
        %567 = vmatpush1.bf16.msra.mxu0 %v484
        %568 = vmatprep.subr.bf16.mxu0 0
        %569 = vmatpush1.bf16.msra.mxu0 %v487
        %570 = vmatprep.subr.bf16.mxu0 0
        %571 = vmatpush1.bf16.msra.mxu0 %v490
        %572 = vmatprep.subr.bf16.mxu0 0
        %573 = vmatpush1.bf16.msra.mxu0 0
        %574 = vmatprep.subr.bf16.mxu0 0
        %575 = vmatpush1.bf16.msra.mxu0 0
        %576 = vmatprep.subr.bf16.mxu0 0
        %577 = vmatpush1.bf16.msra.mxu0 0
        %578 = vmatprep.subr.bf16.mxu0 0
        %579 = vmatpush1.bf16.msra.mxu0 0
        %580 = vmatprep.subr.bf16.mxu0 0
        %581 = vmatpush1.bf16.msra.mxu0 0
        %582 = vmatprep.subr.bf16.mxu0 0
        %583 = vmatpush1.bf16.msra.mxu0 0
        %584 = vmatprep.subr.bf16.mxu0 0
        %585 = vmatpush1.bf16.msra.mxu0 0
        %586 = vmatprep.subr.bf16.mxu0 0
        %587 = vmatpush1.bf16.msra.mxu0 0
        %588 = vmatprep.mubr.bf16.mxu0 0
        %589 = vmatmul.mubr.bf16.gmra.mrb[0].mxu0 %v354
        %v590 = vpop.f32.mrb[0].mxu0
        %v591 = vadd.f32 0.0, %v590
        %v592 = vpop.f32.mrb[0].mxu0
        %v593 = vpop.f32.mrb[0].mxu0
        %v594 = vpop.f32.mrb[0].mxu0
        %595 = vdwg.mxu0
        %v596 = vld [vmem:[%s5] sm:$0x1]
        %v597 = vlaneseq
        %v598 = vshrl.u32 %v597, 7
        %v599 = vsub.s32 0, %v598
        %v600 = vrot.slane %v596, %v599
        %v601 = vadd.f32 %v550, %v600
        %603 = vrot.lane.b32.xlu0 %v601, 112
        %v604 = vpop.permute.xlu0 %603
        %606 = vrot.lane.b32.xlu0 %v601, 96
        %v607 = vpop.permute.xlu0 %606
        %609 = vrot.lane.b32.xlu0 %v601, 80
        %v610 = vpop.permute.xlu0 %609
        %612 = vrot.lane.b32.xlu0 %v601, 64
        %v613 = vpop.permute.xlu0 %612
        %615 = vrot.lane.b32.xlu0 %v601, 48
        %v616 = vpop.permute.xlu0 %615
        %618 = vrot.lane.b32.xlu0 %v601, 32
        %v619 = vpop.permute.xlu0 %618
        %621 = vrot.lane.b32.xlu0 %v601, 16
        %v622 = vpop.permute.xlu0 %621
        %v624 = vcombine.low %v601, %v607
        %v625 = vcombine.high %v601, %v607
        %v627 = vunpack.c.l.s4 1983009808
        %v628 = vunpack.c.0.s8 %v627
        %v629 = vlaneseq
        %v630 = vshrl.u32 %v629, 7
        %v631 = vsub.s32 %v628, %v630
        %v632 = vrot.slane %v624, %v631
        %v634 = vunpack.c.l.s4 1983009808
        %v635 = vunpack.c.0.s8 %v634
        %v636 = vlaneseq
        %v637 = vshrl.u32 %v636, 7
        %v638 = vsub.s32 %v635, %v637
        %v639 = vrot.slane %v625, %v638
        %v640 = vcombine.low %v604, %v610
        %v641 = vcombine.high %v604, %v610
        %v643 = vunpack.c.l.s4 1983009808
        %v644 = vunpack.c.0.s8 %v643
        %v645 = vlaneseq
        %v646 = vshrl.u32 %v645, 7
        %v647 = vsub.s32 %v644, %v646
        %v648 = vrot.slane %v640, %v647
        %v650 = vunpack.c.l.s4 1983009808
        %v651 = vunpack.c.0.s8 %v650
        %v652 = vlaneseq
        %v653 = vshrl.u32 %v652, 7
        %v654 = vsub.s32 %v651, %v653
        %v655 = vrot.slane %v641, %v654
        %v656 = vcombine.low %v613, %v619
        %v657 = vcombine.high %v613, %v619
        %v659 = vunpack.c.l.s4 1983009808
        %v660 = vunpack.c.0.s8 %v659
        %v661 = vlaneseq
        %v662 = vshrl.u32 %v661, 7
        %v663 = vsub.s32 %v660, %v662
        %v664 = vrot.slane %v656, %v663
        %v666 = vunpack.c.l.s4 1983009808
        %v667 = vunpack.c.0.s8 %v666
        %v668 = vlaneseq
        %v669 = vshrl.u32 %v668, 7
        %v670 = vsub.s32 %v667, %v669
        %v671 = vrot.slane %v657, %v670
        %v672 = vcombine.low %v616, %v622
        %v673 = vcombine.high %v616, %v622
        %v675 = vunpack.c.l.s4 1983009808
        %v676 = vunpack.c.0.s8 %v675
        %v677 = vlaneseq
        %v678 = vshrl.u32 %v677, 7
        %v679 = vsub.s32 %v676, %v678
        %v680 = vrot.slane %v672, %v679
        %v682 = vunpack.c.l.s4 1983009808
        %v683 = vunpack.c.0.s8 %v682
        %v684 = vlaneseq
        %v685 = vshrl.u32 %v684, 7
        %v686 = vsub.s32 %v683, %v685
        %v687 = vrot.slane %v673, %v686
        %v688 = vcombine.low %v632, %v648
        %v689 = vcombine.high %v632, %v648
        %v691 = vunpack.c.l.s4 1934713408
        %v692 = vunpack.c.0.s8 %v691
        %v693 = vlaneseq
        %v694 = vshrl.u32 %v693, 7
        %v695 = vsub.s32 %v692, %v694
        %v696 = vrot.slane %v688, %v695
        %v698 = vunpack.c.l.s4 1934713408
        %v699 = vunpack.c.0.s8 %v698
        %v700 = vlaneseq
        %v701 = vshrl.u32 %v700, 7
        %v702 = vsub.s32 %v699, %v701
        %v703 = vrot.slane %v689, %v702
        %v704 = vcombine.low %v639, %v655
        %v705 = vcombine.high %v639, %v655
        %v707 = vunpack.c.l.s4 1934713408
        %v708 = vunpack.c.0.s8 %v707
        %v709 = vlaneseq
        %v710 = vshrl.u32 %v709, 7
        %v711 = vsub.s32 %v708, %v710
        %v712 = vrot.slane %v704, %v711
        %v714 = vunpack.c.l.s4 1934713408
        %v715 = vunpack.c.0.s8 %v714
        %v716 = vlaneseq
        %v717 = vshrl.u32 %v716, 7
        %v718 = vsub.s32 %v715, %v717
        %v719 = vrot.slane %v705, %v718
        %v720 = vcombine.low %v664, %v680
        %v721 = vcombine.high %v664, %v680
        %v723 = vunpack.c.l.s4 1934713408
        %v724 = vunpack.c.0.s8 %v723
        %v725 = vlaneseq
        %v726 = vshrl.u32 %v725, 7
        %v727 = vsub.s32 %v724, %v726
        %v728 = vrot.slane %v720, %v727
        %v730 = vunpack.c.l.s4 1934713408
        %v731 = vunpack.c.0.s8 %v730
        %v732 = vlaneseq
        %v733 = vshrl.u32 %v732, 7
        %v734 = vsub.s32 %v731, %v733
        %v735 = vrot.slane %v721, %v734
        %v736 = vcombine.low %v671, %v687
        %v737 = vcombine.high %v671, %v687
        %v739 = vunpack.c.l.s4 1934713408
        %v740 = vunpack.c.0.s8 %v739
        %v741 = vlaneseq
        %v742 = vshrl.u32 %v741, 7
        %v743 = vsub.s32 %v740, %v742
        %v744 = vrot.slane %v736, %v743
        %v746 = vunpack.c.l.s4 1934713408
        %v747 = vunpack.c.0.s8 %v746
        %v748 = vlaneseq
        %v749 = vshrl.u32 %v748, 7
        %v750 = vsub.s32 %v747, %v749
        %v751 = vrot.slane %v737, %v750
        %v752 = vcombine.low %v696, %v728
        %v753 = vcombine.high %v696, %v728
        %v754 = vcombine.low %v703, %v735
        %v755 = vcombine.high %v703, %v735
        %v756 = vcombine.low %v712, %v744
        %v757 = vcombine.high %v712, %v744
        %v758 = vcombine.low %v719, %v751
        %v759 = vcombine.high %v719, %v751
        %v760 = vcombine.low %v752, %v754
        %v761 = vcombine.high %v752, %v754
        %v763 = vunpack.c.l.s4 1983009808
        %v764 = vunpack.c.0.s8 %v763
        %v765 = vlaneseq
        %v766 = vshrl.u32 %v765, 7
        %v767 = vsub.s32 %v764, %v766
        %v768 = vrot.slane %v760, %v767
        %v770 = vunpack.c.l.s4 1983009808
        %v771 = vunpack.c.0.s8 %v770
        %v772 = vlaneseq
        %v773 = vshrl.u32 %v772, 7
        %v774 = vsub.s32 %v771, %v773
        %v775 = vrot.slane %v761, %v774
        %v776 = vcombine.low %v753, %v755
        %v777 = vcombine.high %v753, %v755
        %v779 = vunpack.c.l.s4 1983009808
        %v780 = vunpack.c.0.s8 %v779
        %v781 = vlaneseq
        %v782 = vshrl.u32 %v781, 7
        %v783 = vsub.s32 %v780, %v782
        %v784 = vrot.slane %v776, %v783
        %v786 = vunpack.c.l.s4 1983009808
        %v787 = vunpack.c.0.s8 %v786
        %v788 = vlaneseq
        %v789 = vshrl.u32 %v788, 7
        %v790 = vsub.s32 %v787, %v789
        %v791 = vrot.slane %v777, %v790
        %v792 = vcombine.low %v756, %v758
        %v793 = vcombine.high %v756, %v758
        %v795 = vunpack.c.l.s4 1983009808
        %v796 = vunpack.c.0.s8 %v795
        %v797 = vlaneseq
        %v798 = vshrl.u32 %v797, 7
        %v799 = vsub.s32 %v796, %v798
        %v800 = vrot.slane %v792, %v799
        %v802 = vunpack.c.l.s4 1983009808
        %v803 = vunpack.c.0.s8 %v802
        %v804 = vlaneseq
        %v805 = vshrl.u32 %v804, 7
        %v806 = vsub.s32 %v803, %v805
        %v807 = vrot.slane %v793, %v806
        %v808 = vcombine.low %v757, %v759
        %v809 = vcombine.high %v757, %v759
        %v811 = vunpack.c.l.s4 1983009808
        %v812 = vunpack.c.0.s8 %v811
        %v813 = vlaneseq
        %v814 = vshrl.u32 %v813, 7
        %v815 = vsub.s32 %v812, %v814
        %v816 = vrot.slane %v808, %v815
        %v818 = vunpack.c.l.s4 1983009808
        %v819 = vunpack.c.0.s8 %v818
        %v820 = vlaneseq
        %v821 = vshrl.u32 %v820, 7
        %v822 = vsub.s32 %v819, %v821
        %v823 = vrot.slane %v809, %v822
        %v824 = vcombine.low %v768, %v784
        %v825 = vcombine.high %v768, %v784
        %v827 = vunpack.c.l.s4 1934713408
        %v828 = vunpack.c.0.s8 %v827
        %v829 = vlaneseq
        %v830 = vshrl.u32 %v829, 7
        %v831 = vsub.s32 %v828, %v830
        %v832 = vrot.slane %v824, %v831
        %v834 = vunpack.c.l.s4 1934713408
        %v835 = vunpack.c.0.s8 %v834
        %v836 = vlaneseq
        %v837 = vshrl.u32 %v836, 7
        %v838 = vsub.s32 %v835, %v837
        %v839 = vrot.slane %v825, %v838
        %v840 = vcombine.low %v775, %v791
        %v841 = vcombine.high %v775, %v791
        %v843 = vunpack.c.l.s4 1934713408
        %v844 = vunpack.c.0.s8 %v843
        %v845 = vlaneseq
        %v846 = vshrl.u32 %v845, 7
        %v847 = vsub.s32 %v844, %v846
        %v848 = vrot.slane %v840, %v847
        %v850 = vunpack.c.l.s4 1934713408
        %v851 = vunpack.c.0.s8 %v850
        %v852 = vlaneseq
        %v853 = vshrl.u32 %v852, 7
        %v854 = vsub.s32 %v851, %v853
        %v855 = vrot.slane %v841, %v854
        %v856 = vcombine.low %v800, %v816
        %v857 = vcombine.high %v800, %v816
        %v859 = vunpack.c.l.s4 1934713408
        %v860 = vunpack.c.0.s8 %v859
        %v861 = vlaneseq
        %v862 = vshrl.u32 %v861, 7
        %v863 = vsub.s32 %v860, %v862
        %v864 = vrot.slane %v856, %v863
        %v866 = vunpack.c.l.s4 1934713408
        %v867 = vunpack.c.0.s8 %v866
        %v868 = vlaneseq
        %v869 = vshrl.u32 %v868, 7
        %v870 = vsub.s32 %v867, %v869
        %v871 = vrot.slane %v857, %v870
        %v872 = vcombine.low %v807, %v823
        %v873 = vcombine.high %v807, %v823
        %v875 = vunpack.c.l.s4 1934713408
        %v876 = vunpack.c.0.s8 %v875
        %v877 = vlaneseq
        %v878 = vshrl.u32 %v877, 7
        %v879 = vsub.s32 %v876, %v878
        %v880 = vrot.slane %v872, %v879
        %v882 = vunpack.c.l.s4 1934713408
        %v883 = vunpack.c.0.s8 %v882
        %v884 = vlaneseq
        %v885 = vshrl.u32 %v884, 7
        %v886 = vsub.s32 %v883, %v885
        %v887 = vrot.slane %v873, %v886
        %v888 = vcombine.low %v832, %v864
        %v889 = vcombine.high %v832, %v864
        %v890 = vcombine.low %v839, %v871
        %v891 = vcombine.high %v839, %v871
        %v892 = vcombine.low %v848, %v880
        %v893 = vcombine.high %v848, %v880
        %v894 = vcombine.low %v855, %v887
        %v895 = vcombine.high %v855, %v887
        %v896 = vpack.c.bf16 %v888, %v888
        %v897 = vpack.c.bf16 %v889, %v889
        %v898 = vpack.c.bf16 %v890, %v890
        %v899 = vpack.c.bf16 %v891, %v891
        %v900 = vpack.c.bf16 %v892, %v892
        %v901 = vpack.c.bf16 %v893, %v893
        %v902 = vpack.c.bf16 %v894, %v894
        %v903 = vpack.c.bf16 %v895, %v895
        %v904 = vld [vmem:[%s5 + $0x1] sm:$0x1]
        %v905 = vlaneseq
        %v906 = vshrl.u32 %v905, 7
        %v907 = vsub.s32 0, %v906
        %v908 = vrot.slane %v904, %v907
        %v909 = vadd.f32 %v552, %v908
        %911 = vrot.lane.b32.xlu0 %v909, 112
        %v912 = vpop.permute.xlu0 %911
        %914 = vrot.lane.b32.xlu0 %v909, 96
        %v915 = vpop.permute.xlu0 %914
        %917 = vrot.lane.b32.xlu0 %v909, 80
        %v918 = vpop.permute.xlu0 %917
        %920 = vrot.lane.b32.xlu0 %v909, 64
        %v921 = vpop.permute.xlu0 %920
        %923 = vrot.lane.b32.xlu0 %v909, 48
        %v924 = vpop.permute.xlu0 %923
        %926 = vrot.lane.b32.xlu0 %v909, 32
        %v927 = vpop.permute.xlu0 %926
        %929 = vrot.lane.b32.xlu0 %v909, 16
        %v930 = vpop.permute.xlu0 %929
        %v932 = vcombine.low %v909, %v915
        %v933 = vcombine.high %v909, %v915
        %v935 = vunpack.c.l.s4 1983009808
        %v936 = vunpack.c.0.s8 %v935
        %v937 = vlaneseq
        %v938 = vshrl.u32 %v937, 7
        %v939 = vsub.s32 %v936, %v938
        %v940 = vrot.slane %v932, %v939
        %v942 = vunpack.c.l.s4 1983009808
        %v943 = vunpack.c.0.s8 %v942
        %v944 = vlaneseq
        %v945 = vshrl.u32 %v944, 7
        %v946 = vsub.s32 %v943, %v945
        %v947 = vrot.slane %v933, %v946
        %v948 = vcombine.low %v912, %v918
        %v949 = vcombine.high %v912, %v918
        %v951 = vunpack.c.l.s4 1983009808
        %v952 = vunpack.c.0.s8 %v951
        %v953 = vlaneseq
        %v954 = vshrl.u32 %v953, 7
        %v955 = vsub.s32 %v952, %v954
        %v956 = vrot.slane %v948, %v955
        %v958 = vunpack.c.l.s4 1983009808
        %v959 = vunpack.c.0.s8 %v958
        %v960 = vlaneseq
        %v961 = vshrl.u32 %v960, 7
        %v962 = vsub.s32 %v959, %v961
        %v963 = vrot.slane %v949, %v962
        %v964 = vcombine.low %v921, %v927
        %v965 = vcombine.high %v921, %v927
        %v967 = vunpack.c.l.s4 1983009808
        %v968 = vunpack.c.0.s8 %v967
        %v969 = vlaneseq
        %v970 = vshrl.u32 %v969, 7
        %v971 = vsub.s32 %v968, %v970
        %v972 = vrot.slane %v964, %v971
        %v974 = vunpack.c.l.s4 1983009808
        %v975 = vunpack.c.0.s8 %v974
        %v976 = vlaneseq
        %v977 = vshrl.u32 %v976, 7
        %v978 = vsub.s32 %v975, %v977
        %v979 = vrot.slane %v965, %v978
        %v980 = vcombine.low %v924, %v930
        %v981 = vcombine.high %v924, %v930
        %v983 = vunpack.c.l.s4 1983009808
        %v984 = vunpack.c.0.s8 %v983
        %v985 = vlaneseq
        %v986 = vshrl.u32 %v985, 7
        %v987 = vsub.s32 %v984, %v986
        %v988 = vrot.slane %v980, %v987
        %v990 = vunpack.c.l.s4 1983009808
        %v991 = vunpack.c.0.s8 %v990
        %v992 = vlaneseq
        %v993 = vshrl.u32 %v992, 7
        %v994 = vsub.s32 %v991, %v993
        %v995 = vrot.slane %v981, %v994
        %v996 = vcombine.low %v940, %v956
        %v997 = vcombine.high %v940, %v956
        %v999 = vunpack.c.l.s4 1934713408
        %v1000 = vunpack.c.0.s8 %v999
        %v1001 = vlaneseq
        %v1002 = vshrl.u32 %v1001, 7
        %v1003 = vsub.s32 %v1000, %v1002
        %v1004 = vrot.slane %v996, %v1003
        %v1006 = vunpack.c.l.s4 1934713408
        %v1007 = vunpack.c.0.s8 %v1006
        %v1008 = vlaneseq
        %v1009 = vshrl.u32 %v1008, 7
        %v1010 = vsub.s32 %v1007, %v1009
        %v1011 = vrot.slane %v997, %v1010
        %v1012 = vcombine.low %v947, %v963
        %v1013 = vcombine.high %v947, %v963
        %v1015 = vunpack.c.l.s4 1934713408
        %v1016 = vunpack.c.0.s8 %v1015
        %v1017 = vlaneseq
        %v1018 = vshrl.u32 %v1017, 7
        %v1019 = vsub.s32 %v1016, %v1018
        %v1020 = vrot.slane %v1012, %v1019
        %v1022 = vunpack.c.l.s4 1934713408
        %v1023 = vunpack.c.0.s8 %v1022
        %v1024 = vlaneseq
        %v1025 = vshrl.u32 %v1024, 7
        %v1026 = vsub.s32 %v1023, %v1025
        %v1027 = vrot.slane %v1013, %v1026
        %v1028 = vcombine.low %v972, %v988
        %v1029 = vcombine.high %v972, %v988
        %v1031 = vunpack.c.l.s4 1934713408
        %v1032 = vunpack.c.0.s8 %v1031
        %v1033 = vlaneseq
        %v1034 = vshrl.u32 %v1033, 7
        %v1035 = vsub.s32 %v1032, %v1034
        %v1036 = vrot.slane %v1028, %v1035
        %v1038 = vunpack.c.l.s4 1934713408
        %v1039 = vunpack.c.0.s8 %v1038
        %v1040 = vlaneseq
        %v1041 = vshrl.u32 %v1040, 7
        %v1042 = vsub.s32 %v1039, %v1041
        %v1043 = vrot.slane %v1029, %v1042
        %v1044 = vcombine.low %v979, %v995
        %v1045 = vcombine.high %v979, %v995
        %v1047 = vunpack.c.l.s4 1934713408
        %v1048 = vunpack.c.0.s8 %v1047
        %v1049 = vlaneseq
        %v1050 = vshrl.u32 %v1049, 7
        %v1051 = vsub.s32 %v1048, %v1050
        %v1052 = vrot.slane %v1044, %v1051
        %v1054 = vunpack.c.l.s4 1934713408
        %v1055 = vunpack.c.0.s8 %v1054
        %v1056 = vlaneseq
        %v1057 = vshrl.u32 %v1056, 7
        %v1058 = vsub.s32 %v1055, %v1057
        %v1059 = vrot.slane %v1045, %v1058
        %v1060 = vcombine.low %v1004, %v1036
        %v1061 = vcombine.high %v1004, %v1036
        %v1062 = vcombine.low %v1011, %v1043
        %v1063 = vcombine.high %v1011, %v1043
        %v1064 = vcombine.low %v1020, %v1052
        %v1065 = vcombine.high %v1020, %v1052
        %v1066 = vcombine.low %v1027, %v1059
        %v1067 = vcombine.high %v1027, %v1059
        %v1068 = vcombine.low %v1060, %v1062
        %v1069 = vcombine.high %v1060, %v1062
        %v1071 = vunpack.c.l.s4 1983009808
        %v1072 = vunpack.c.0.s8 %v1071
        %v1073 = vlaneseq
        %v1074 = vshrl.u32 %v1073, 7
        %v1075 = vsub.s32 %v1072, %v1074
        %v1076 = vrot.slane %v1068, %v1075
        %v1078 = vunpack.c.l.s4 1983009808
        %v1079 = vunpack.c.0.s8 %v1078
        %v1080 = vlaneseq
        %v1081 = vshrl.u32 %v1080, 7
        %v1082 = vsub.s32 %v1079, %v1081
        %v1083 = vrot.slane %v1069, %v1082
        %v1084 = vcombine.low %v1061, %v1063
        %v1085 = vcombine.high %v1061, %v1063
        %v1087 = vunpack.c.l.s4 1983009808
        %v1088 = vunpack.c.0.s8 %v1087
        %v1089 = vlaneseq
        %v1090 = vshrl.u32 %v1089, 7
        %v1091 = vsub.s32 %v1088, %v1090
        %v1092 = vrot.slane %v1084, %v1091
        %v1094 = vunpack.c.l.s4 1983009808
        %v1095 = vunpack.c.0.s8 %v1094
        %v1096 = vlaneseq
        %v1097 = vshrl.u32 %v1096, 7
        %v1098 = vsub.s32 %v1095, %v1097
        %v1099 = vrot.slane %v1085, %v1098
        %v1100 = vcombine.low %v1064, %v1066
        %v1101 = vcombine.high %v1064, %v1066
        %v1103 = vunpack.c.l.s4 1983009808
        %v1104 = vunpack.c.0.s8 %v1103
        %v1105 = vlaneseq
        %v1106 = vshrl.u32 %v1105, 7
        %v1107 = vsub.s32 %v1104, %v1106
        %v1108 = vrot.slane %v1100, %v1107
        %v1110 = vunpack.c.l.s4 1983009808
        %v1111 = vunpack.c.0.s8 %v1110
        %v1112 = vlaneseq
        %v1113 = vshrl.u32 %v1112, 7
        %v1114 = vsub.s32 %v1111, %v1113
        %v1115 = vrot.slane %v1101, %v1114
        %v1116 = vcombine.low %v1065, %v1067
        %v1117 = vcombine.high %v1065, %v1067
        %v1119 = vunpack.c.l.s4 1983009808
        %v1120 = vunpack.c.0.s8 %v1119
        %v1121 = vlaneseq
        %v1122 = vshrl.u32 %v1121, 7
        %v1123 = vsub.s32 %v1120, %v1122
        %v1124 = vrot.slane %v1116, %v1123
        %v1126 = vunpack.c.l.s4 1983009808
        %v1127 = vunpack.c.0.s8 %v1126
        %v1128 = vlaneseq
        %v1129 = vshrl.u32 %v1128, 7
        %v1130 = vsub.s32 %v1127, %v1129
        %v1131 = vrot.slane %v1117, %v1130
        %v1132 = vcombine.low %v1076, %v1092
        %v1133 = vcombine.high %v1076, %v1092
        %v1135 = vunpack.c.l.s4 1934713408
        %v1136 = vunpack.c.0.s8 %v1135
        %v1137 = vlaneseq
        %v1138 = vshrl.u32 %v1137, 7
        %v1139 = vsub.s32 %v1136, %v1138
        %v1140 = vrot.slane %v1132, %v1139
        %v1142 = vunpack.c.l.s4 1934713408
        %v1143 = vunpack.c.0.s8 %v1142
        %v1144 = vlaneseq
        %v1145 = vshrl.u32 %v1144, 7
        %v1146 = vsub.s32 %v1143, %v1145
        %v1147 = vrot.slane %v1133, %v1146
        %v1148 = vcombine.low %v1083, %v1099
        %v1149 = vcombine.high %v1083, %v1099
        %v1151 = vunpack.c.l.s4 1934713408
        %v1152 = vunpack.c.0.s8 %v1151
        %v1153 = vlaneseq
        %v1154 = vshrl.u32 %v1153, 7
        %v1155 = vsub.s32 %v1152, %v1154
        %v1156 = vrot.slane %v1148, %v1155
        %v1158 = vunpack.c.l.s4 1934713408
        %v1159 = vunpack.c.0.s8 %v1158
        %v1160 = vlaneseq
        %v1161 = vshrl.u32 %v1160, 7
        %v1162 = vsub.s32 %v1159, %v1161
        %v1163 = vrot.slane %v1149, %v1162
        %v1164 = vcombine.low %v1108, %v1124
        %v1165 = vcombine.high %v1108, %v1124
        %v1167 = vunpack.c.l.s4 1934713408
        %v1168 = vunpack.c.0.s8 %v1167
        %v1169 = vlaneseq
        %v1170 = vshrl.u32 %v1169, 7
        %v1171 = vsub.s32 %v1168, %v1170
        %v1172 = vrot.slane %v1164, %v1171
        %v1174 = vunpack.c.l.s4 1934713408
        %v1175 = vunpack.c.0.s8 %v1174
        %v1176 = vlaneseq
        %v1177 = vshrl.u32 %v1176, 7
        %v1178 = vsub.s32 %v1175, %v1177
        %v1179 = vrot.slane %v1165, %v1178
        %v1180 = vcombine.low %v1115, %v1131
        %v1181 = vcombine.high %v1115, %v1131
        %v1183 = vunpack.c.l.s4 1934713408
        %v1184 = vunpack.c.0.s8 %v1183
        %v1185 = vlaneseq
        %v1186 = vshrl.u32 %v1185, 7
        %v1187 = vsub.s32 %v1184, %v1186
        %v1188 = vrot.slane %v1180, %v1187
        %v1190 = vunpack.c.l.s4 1934713408
        %v1191 = vunpack.c.0.s8 %v1190
        %v1192 = vlaneseq
        %v1193 = vshrl.u32 %v1192, 7
        %v1194 = vsub.s32 %v1191, %v1193
        %v1195 = vrot.slane %v1181, %v1194
        %v1196 = vcombine.low %v1140, %v1172
        %v1197 = vcombine.high %v1140, %v1172
        %v1198 = vcombine.low %v1147, %v1179
        %v1199 = vcombine.high %v1147, %v1179
        %v1200 = vcombine.low %v1156, %v1188
        %v1201 = vcombine.high %v1156, %v1188
        %v1202 = vcombine.low %v1163, %v1195
        %v1203 = vcombine.high %v1163, %v1195
        %v1204 = vpack.c.bf16 %v1196, %v1196
        %v1205 = vpack.c.bf16 %v1197, %v1197
        %v1206 = vpack.c.bf16 %v1198, %v1198
        %v1207 = vpack.c.bf16 %v1199, %v1199
        %v1208 = vpack.c.bf16 %v1200, %v1200
        %v1209 = vpack.c.bf16 %v1201, %v1201
        %v1210 = vpack.c.bf16 %v1202, %v1202
        %v1211 = vpack.c.bf16 %v1203, %v1203
        %v1212 = vld [vmem:[%s5 + $0x2] sm:$0x1]
        %v1213 = vlaneseq
        %v1214 = vshrl.u32 %v1213, 7
        %v1215 = vsub.s32 0, %v1214
        %v1216 = vrot.slane %v1212, %v1215
        %v1217 = vadd.f32 %v591, %v1216
        %1219 = vrot.lane.b32.xlu0 %v1217, 112
        %v1220 = vpop.permute.xlu0 %1219
        %1222 = vrot.lane.b32.xlu0 %v1217, 96
        %v1223 = vpop.permute.xlu0 %1222
        %1225 = vrot.lane.b32.xlu0 %v1217, 80
        %v1226 = vpop.permute.xlu0 %1225
        %1228 = vrot.lane.b32.xlu0 %v1217, 64
        %v1229 = vpop.permute.xlu0 %1228
        %1231 = vrot.lane.b32.xlu0 %v1217, 48
        %v1232 = vpop.permute.xlu0 %1231
        %1234 = vrot.lane.b32.xlu0 %v1217, 32
        %v1235 = vpop.permute.xlu0 %1234
        %1237 = vrot.lane.b32.xlu0 %v1217, 16
        %v1238 = vpop.permute.xlu0 %1237
        %v1240 = vcombine.low %v1217, %v1223
        %v1241 = vcombine.high %v1217, %v1223
        %v1243 = vunpack.c.l.s4 1983009808
        %v1244 = vunpack.c.0.s8 %v1243
        %v1245 = vlaneseq
        %v1246 = vshrl.u32 %v1245, 7
        %v1247 = vsub.s32 %v1244, %v1246
        %v1248 = vrot.slane %v1240, %v1247
        %v1250 = vunpack.c.l.s4 1983009808
        %v1251 = vunpack.c.0.s8 %v1250
        %v1252 = vlaneseq
        %v1253 = vshrl.u32 %v1252, 7
        %v1254 = vsub.s32 %v1251, %v1253
        %v1255 = vrot.slane %v1241, %v1254
        %v1256 = vcombine.low %v1220, %v1226
        %v1257 = vcombine.high %v1220, %v1226
        %v1259 = vunpack.c.l.s4 1983009808
        %v1260 = vunpack.c.0.s8 %v1259
        %v1261 = vlaneseq
        %v1262 = vshrl.u32 %v1261, 7
        %v1263 = vsub.s32 %v1260, %v1262
        %v1264 = vrot.slane %v1256, %v1263
        %v1266 = vunpack.c.l.s4 1983009808
        %v1267 = vunpack.c.0.s8 %v1266
        %v1268 = vlaneseq
        %v1269 = vshrl.u32 %v1268, 7
        %v1270 = vsub.s32 %v1267, %v1269
        %v1271 = vrot.slane %v1257, %v1270
        %v1272 = vcombine.low %v1229, %v1235
        %v1273 = vcombine.high %v1229, %v1235
        %v1275 = vunpack.c.l.s4 1983009808
        %v1276 = vunpack.c.0.s8 %v1275
        %v1277 = vlaneseq
        %v1278 = vshrl.u32 %v1277, 7
        %v1279 = vsub.s32 %v1276, %v1278
        %v1280 = vrot.slane %v1272, %v1279
        %v1282 = vunpack.c.l.s4 1983009808
        %v1283 = vunpack.c.0.s8 %v1282
        %v1284 = vlaneseq
        %v1285 = vshrl.u32 %v1284, 7
        %v1286 = vsub.s32 %v1283, %v1285
        %v1287 = vrot.slane %v1273, %v1286
        %v1288 = vcombine.low %v1232, %v1238
        %v1289 = vcombine.high %v1232, %v1238
        %v1291 = vunpack.c.l.s4 1983009808
        %v1292 = vunpack.c.0.s8 %v1291
        %v1293 = vlaneseq
        %v1294 = vshrl.u32 %v1293, 7
        %v1295 = vsub.s32 %v1292, %v1294
        %v1296 = vrot.slane %v1288, %v1295
        %v1298 = vunpack.c.l.s4 1983009808
        %v1299 = vunpack.c.0.s8 %v1298
        %v1300 = vlaneseq
        %v1301 = vshrl.u32 %v1300, 7
        %v1302 = vsub.s32 %v1299, %v1301
        %v1303 = vrot.slane %v1289, %v1302
        %v1304 = vcombine.low %v1248, %v1264
        %v1305 = vcombine.high %v1248, %v1264
        %v1307 = vunpack.c.l.s4 1934713408
        %v1308 = vunpack.c.0.s8 %v1307
        %v1309 = vlaneseq
        %v1310 = vshrl.u32 %v1309, 7
        %v1311 = vsub.s32 %v1308, %v1310
        %v1312 = vrot.slane %v1304, %v1311
        %v1314 = vunpack.c.l.s4 1934713408
        %v1315 = vunpack.c.0.s8 %v1314
        %v1316 = vlaneseq
        %v1317 = vshrl.u32 %v1316, 7
        %v1318 = vsub.s32 %v1315, %v1317
        %v1319 = vrot.slane %v1305, %v1318
        %v1320 = vcombine.low %v1255, %v1271
        %v1321 = vcombine.high %v1255, %v1271
        %v1323 = vunpack.c.l.s4 1934713408
        %v1324 = vunpack.c.0.s8 %v1323
        %v1325 = vlaneseq
        %v1326 = vshrl.u32 %v1325, 7
        %v1327 = vsub.s32 %v1324, %v1326
        %v1328 = vrot.slane %v1320, %v1327
        %v1330 = vunpack.c.l.s4 1934713408
        %v1331 = vunpack.c.0.s8 %v1330
        %v1332 = vlaneseq
        %v1333 = vshrl.u32 %v1332, 7
        %v1334 = vsub.s32 %v1331, %v1333
        %v1335 = vrot.slane %v1321, %v1334
        %v1336 = vcombine.low %v1280, %v1296
        %v1337 = vcombine.high %v1280, %v1296
        %v1339 = vunpack.c.l.s4 1934713408
        %v1340 = vunpack.c.0.s8 %v1339
        %v1341 = vlaneseq
        %v1342 = vshrl.u32 %v1341, 7
        %v1343 = vsub.s32 %v1340, %v1342
        %v1344 = vrot.slane %v1336, %v1343
        %v1346 = vunpack.c.l.s4 1934713408
        %v1347 = vunpack.c.0.s8 %v1346
        %v1348 = vlaneseq
        %v1349 = vshrl.u32 %v1348, 7
        %v1350 = vsub.s32 %v1347, %v1349
        %v1351 = vrot.slane %v1337, %v1350
        %v1352 = vcombine.low %v1287, %v1303
        %v1353 = vcombine.high %v1287, %v1303
        %v1355 = vunpack.c.l.s4 1934713408
        %v1356 = vunpack.c.0.s8 %v1355
        %v1357 = vlaneseq
        %v1358 = vshrl.u32 %v1357, 7
        %v1359 = vsub.s32 %v1356, %v1358
        %v1360 = vrot.slane %v1352, %v1359
        %v1362 = vunpack.c.l.s4 1934713408
        %v1363 = vunpack.c.0.s8 %v1362
        %v1364 = vlaneseq
        %v1365 = vshrl.u32 %v1364, 7
        %v1366 = vsub.s32 %v1363, %v1365
        %v1367 = vrot.slane %v1353, %v1366
        %v1368 = vcombine.low %v1312, %v1344
        %v1369 = vcombine.high %v1312, %v1344
        %v1370 = vcombine.low %v1319, %v1351
        %v1371 = vcombine.high %v1319, %v1351
        %v1372 = vcombine.low %v1328, %v1360
        %v1373 = vcombine.high %v1328, %v1360
        %v1374 = vcombine.low %v1335, %v1367
        %v1375 = vcombine.high %v1335, %v1367
        %v1376 = vcombine.low %v1368, %v1370
        %v1377 = vcombine.high %v1368, %v1370
        %v1379 = vunpack.c.l.s4 1983009808
        %v1380 = vunpack.c.0.s8 %v1379
        %v1381 = vlaneseq
        %v1382 = vshrl.u32 %v1381, 7
        %v1383 = vsub.s32 %v1380, %v1382
        %v1384 = vrot.slane %v1376, %v1383
        %v1386 = vunpack.c.l.s4 1983009808
        %v1387 = vunpack.c.0.s8 %v1386
        %v1388 = vlaneseq
        %v1389 = vshrl.u32 %v1388, 7
        %v1390 = vsub.s32 %v1387, %v1389
        %v1391 = vrot.slane %v1377, %v1390
        %v1392 = vcombine.low %v1369, %v1371
        %v1393 = vcombine.high %v1369, %v1371
        %v1395 = vunpack.c.l.s4 1983009808
        %v1396 = vunpack.c.0.s8 %v1395
        %v1397 = vlaneseq
        %v1398 = vshrl.u32 %v1397, 7
        %v1399 = vsub.s32 %v1396, %v1398
        %v1400 = vrot.slane %v1392, %v1399
        %v1402 = vunpack.c.l.s4 1983009808
        %v1403 = vunpack.c.0.s8 %v1402
        %v1404 = vlaneseq
        %v1405 = vshrl.u32 %v1404, 7
        %v1406 = vsub.s32 %v1403, %v1405
        %v1407 = vrot.slane %v1393, %v1406
        %v1408 = vcombine.low %v1372, %v1374
        %v1409 = vcombine.high %v1372, %v1374
        %v1411 = vunpack.c.l.s4 1983009808
        %v1412 = vunpack.c.0.s8 %v1411
        %v1413 = vlaneseq
        %v1414 = vshrl.u32 %v1413, 7
        %v1415 = vsub.s32 %v1412, %v1414
        %v1416 = vrot.slane %v1408, %v1415
        %v1418 = vunpack.c.l.s4 1983009808
        %v1419 = vunpack.c.0.s8 %v1418
        %v1420 = vlaneseq
        %v1421 = vshrl.u32 %v1420, 7
        %v1422 = vsub.s32 %v1419, %v1421
        %v1423 = vrot.slane %v1409, %v1422
        %v1424 = vcombine.low %v1373, %v1375
        %v1425 = vcombine.high %v1373, %v1375
        %v1427 = vunpack.c.l.s4 1983009808
        %v1428 = vunpack.c.0.s8 %v1427
        %v1429 = vlaneseq
        %v1430 = vshrl.u32 %v1429, 7
        %v1431 = vsub.s32 %v1428, %v1430
        %v1432 = vrot.slane %v1424, %v1431
        %v1434 = vunpack.c.l.s4 1983009808
        %v1435 = vunpack.c.0.s8 %v1434
        %v1436 = vlaneseq
        %v1437 = vshrl.u32 %v1436, 7
        %v1438 = vsub.s32 %v1435, %v1437
        %v1439 = vrot.slane %v1425, %v1438
        %v1440 = vcombine.low %v1384, %v1400
        %v1441 = vcombine.high %v1384, %v1400
        %v1443 = vunpack.c.l.s4 1934713408
        %v1444 = vunpack.c.0.s8 %v1443
        %v1445 = vlaneseq
        %v1446 = vshrl.u32 %v1445, 7
        %v1447 = vsub.s32 %v1444, %v1446
        %v1448 = vrot.slane %v1440, %v1447
        %v1450 = vunpack.c.l.s4 1934713408
        %v1451 = vunpack.c.0.s8 %v1450
        %v1452 = vlaneseq
        %v1453 = vshrl.u32 %v1452, 7
        %v1454 = vsub.s32 %v1451, %v1453
        %v1455 = vrot.slane %v1441, %v1454
        %v1456 = vcombine.low %v1391, %v1407
        %v1457 = vcombine.high %v1391, %v1407
        %v1459 = vunpack.c.l.s4 1934713408
        %v1460 = vunpack.c.0.s8 %v1459
        %v1461 = vlaneseq
        %v1462 = vshrl.u32 %v1461, 7
        %v1463 = vsub.s32 %v1460, %v1462
        %v1464 = vrot.slane %v1456, %v1463
        %v1466 = vunpack.c.l.s4 1934713408
        %v1467 = vunpack.c.0.s8 %v1466
        %v1468 = vlaneseq
        %v1469 = vshrl.u32 %v1468, 7
        %v1470 = vsub.s32 %v1467, %v1469
        %v1471 = vrot.slane %v1457, %v1470
        %v1472 = vcombine.low %v1416, %v1432
        %v1473 = vcombine.high %v1416, %v1432
        %v1475 = vunpack.c.l.s4 1934713408
        %v1476 = vunpack.c.0.s8 %v1475
        %v1477 = vlaneseq
        %v1478 = vshrl.u32 %v1477, 7
        %v1479 = vsub.s32 %v1476, %v1478
        %v1480 = vrot.slane %v1472, %v1479
        %v1482 = vunpack.c.l.s4 1934713408
        %v1483 = vunpack.c.0.s8 %v1482
        %v1484 = vlaneseq
        %v1485 = vshrl.u32 %v1484, 7
        %v1486 = vsub.s32 %v1483, %v1485
        %v1487 = vrot.slane %v1473, %v1486
        %v1488 = vcombine.low %v1423, %v1439
        %v1489 = vcombine.high %v1423, %v1439
        %v1491 = vunpack.c.l.s4 1934713408
        %v1492 = vunpack.c.0.s8 %v1491
        %v1493 = vlaneseq
        %v1494 = vshrl.u32 %v1493, 7
        %v1495 = vsub.s32 %v1492, %v1494
        %v1496 = vrot.slane %v1488, %v1495
        %v1498 = vunpack.c.l.s4 1934713408
        %v1499 = vunpack.c.0.s8 %v1498
        %v1500 = vlaneseq
        %v1501 = vshrl.u32 %v1500, 7
        %v1502 = vsub.s32 %v1499, %v1501
        %v1503 = vrot.slane %v1489, %v1502
        %v1504 = vcombine.low %v1448, %v1480
        %v1505 = vcombine.high %v1448, %v1480
        %v1506 = vcombine.low %v1455, %v1487
        %v1507 = vcombine.high %v1455, %v1487
        %v1508 = vcombine.low %v1464, %v1496
        %v1509 = vcombine.high %v1464, %v1496
        %v1510 = vcombine.low %v1471, %v1503
        %v1511 = vcombine.high %v1471, %v1503
        %v1512 = vpack.c.bf16 %v1504, %v1504
        %v1513 = vpack.c.bf16 %v1505, %v1505
        %v1514 = vpack.c.bf16 %v1506, %v1506
        %v1515 = vpack.c.bf16 %v1507, %v1507
        %v1516 = vpack.c.bf16 %v1508, %v1508
        %v1517 = vpack.c.bf16 %v1509, %v1509
        %v1518 = vpack.c.bf16 %v1510, %v1510
        %v1519 = vpack.c.bf16 %v1511, %v1511
        %vm1520 = vcmask 130048
        %v1522 = vsel %vm1520, %v896, 0
        %v1525 = vsel %vm1520, %v1204, 0
        %1527 = vmatprep.subr.bf16.mxu0 0
        %1528 = vmatpush1.bf16.xpose.msra.mxu0 %v1525
        %1529 = vmatprep.subr.bf16.mxu0 0
        %1530 = vmatpush1.bf16.xpose.msra.mxu0 0
        %1531 = vmatprep.subr.bf16.mxu0 0
        %1532 = vmatpush1.bf16.xpose.msra.mxu0 0
        %1533 = vmatprep.subr.bf16.mxu0 0
        %1534 = vmatpush1.bf16.xpose.msra.mxu0 0
        %1535 = vmatprep.subr.bf16.mxu0 0
        %1536 = vmatpush1.bf16.xpose.msra.mxu0 0
        %1537 = vmatprep.subr.bf16.mxu0 0
        %1538 = vmatpush1.bf16.xpose.msra.mxu0 0
        %1539 = vmatprep.subr.bf16.mxu0 0
        %1540 = vmatpush1.bf16.xpose.msra.mxu0 0
        %1541 = vmatprep.subr.bf16.mxu0 0
        %1542 = vmatpush1.bf16.xpose.msra.mxu0 0
        %1543 = vmatprep.subr.bf16.mxu0 0
        %1544 = vmatpush1.bf16.xpose.msra.mxu0 0
        %1545 = vmatprep.subr.bf16.mxu0 0
        %1546 = vmatpush1.bf16.xpose.msra.mxu0 0
        %1547 = vmatprep.subr.bf16.mxu0 0
        %1548 = vmatpush1.bf16.xpose.msra.mxu0 0
        %1549 = vmatprep.subr.bf16.mxu0 0
        %1550 = vmatpush1.bf16.xpose.msra.mxu0 0
        %1551 = vmatprep.subr.bf16.mxu0 0
        %1552 = vmatpush1.bf16.xpose.msra.mxu0 0
        %1553 = vmatprep.subr.bf16.mxu0 0
        %1554 = vmatpush1.bf16.xpose.msra.mxu0 0
        %1555 = vmatprep.subr.bf16.mxu0 0
        %1556 = vmatpush1.bf16.xpose.msra.mxu0 0
        %1557 = vmatprep.subr.bf16.mxu0 0
        %1558 = vmatpush1.bf16.xpose.msra.mxu0 0
        %1559 = vmatprep.mubr.bf16.mxu0 0
        %1560 = vmatmul.mubr.bf16.gmra.mrb[0].mxu0 %v1522
        %v1561 = vpop.f32.mrb[0].mxu0
        %v1562 = vadd.f32 0.0, %v1561
        %v1563 = vpop.f32.mrb[0].mxu0
        %v1564 = vpop.f32.mrb[0].mxu0
        %v1565 = vpop.f32.mrb[0].mxu0
        %1566 = vdwg.mxu0
        %v1568 = vsel %vm1520, %v897, 0
        %v1571 = vsel %vm1520, %v1205, 0
        %1573 = vmatprep.subr.bf16.mxu0 0
        %1574 = vmatpush1.bf16.xpose.msra.mxu0 %v1571
        %1575 = vmatprep.subr.bf16.mxu0 0
        %1576 = vmatpush1.bf16.xpose.msra.mxu0 0
        %1577 = vmatprep.subr.bf16.mxu0 0
        %1578 = vmatpush1.bf16.xpose.msra.mxu0 0
        %1579 = vmatprep.subr.bf16.mxu0 0
        %1580 = vmatpush1.bf16.xpose.msra.mxu0 0
        %1581 = vmatprep.subr.bf16.mxu0 0
        %1582 = vmatpush1.bf16.xpose.msra.mxu0 0
        %1583 = vmatprep.subr.bf16.mxu0 0
        %1584 = vmatpush1.bf16.xpose.msra.mxu0 0
        %1585 = vmatprep.subr.bf16.mxu0 0
        %1586 = vmatpush1.bf16.xpose.msra.mxu0 0
        %1587 = vmatprep.subr.bf16.mxu0 0
        %1588 = vmatpush1.bf16.xpose.msra.mxu0 0
        %1589 = vmatprep.subr.bf16.mxu0 0
        %1590 = vmatpush1.bf16.xpose.msra.mxu0 0
        %1591 = vmatprep.subr.bf16.mxu0 0
        %1592 = vmatpush1.bf16.xpose.msra.mxu0 0
        %1593 = vmatprep.subr.bf16.mxu0 0
        %1594 = vmatpush1.bf16.xpose.msra.mxu0 0
        %1595 = vmatprep.subr.bf16.mxu0 0
        %1596 = vmatpush1.bf16.xpose.msra.mxu0 0
        %1597 = vmatprep.subr.bf16.mxu0 0
        %1598 = vmatpush1.bf16.xpose.msra.mxu0 0
        %1599 = vmatprep.subr.bf16.mxu0 0
        %1600 = vmatpush1.bf16.xpose.msra.mxu0 0
        %1601 = vmatprep.subr.bf16.mxu0 0
        %1602 = vmatpush1.bf16.xpose.msra.mxu0 0
        %1603 = vmatprep.subr.bf16.mxu0 0
        %1604 = vmatpush1.bf16.xpose.msra.mxu0 0
        %1605 = vmatprep.mubr.bf16.mxu0 0
        %1606 = vmatmul.mubr.bf16.gmra.mrb[0].mxu0 %v1568
        %v1607 = vpop.f32.mrb[0].mxu0
        %v1608 = vadd.f32 0.0, %v1607
        %v1609 = vpop.f32.mrb[0].mxu0
        %v1610 = vpop.f32.mrb[0].mxu0
        %v1611 = vpop.f32.mrb[0].mxu0
        %1612 = vdwg.mxu0
        %v1614 = vsel %vm1520, %v898, 0
        %v1617 = vsel %vm1520, %v1206, 0
        %1619 = vmatprep.subr.bf16.mxu0 0
        %1620 = vmatpush1.bf16.xpose.msra.mxu0 %v1617
        %1621 = vmatprep.subr.bf16.mxu0 0
        %1622 = vmatpush1.bf16.xpose.msra.mxu0 0
        %1623 = vmatprep.subr.bf16.mxu0 0
        %1624 = vmatpush1.bf16.xpose.msra.mxu0 0
        %1625 = vmatprep.subr.bf16.mxu0 0
        %1626 = vmatpush1.bf16.xpose.msra.mxu0 0
        %1627 = vmatprep.subr.bf16.mxu0 0
        %1628 = vmatpush1.bf16.xpose.msra.mxu0 0
        %1629 = vmatprep.subr.bf16.mxu0 0
        %1630 = vmatpush1.bf16.xpose.msra.mxu0 0
        %1631 = vmatprep.subr.bf16.mxu0 0
        %1632 = vmatpush1.bf16.xpose.msra.mxu0 0
        %1633 = vmatprep.subr.bf16.mxu0 0
        %1634 = vmatpush1.bf16.xpose.msra.mxu0 0
        %1635 = vmatprep.subr.bf16.mxu0 0
        %1636 = vmatpush1.bf16.xpose.msra.mxu0 0
        %1637 = vmatprep.subr.bf16.mxu0 0
        %1638 = vmatpush1.bf16.xpose.msra.mxu0 0
        %1639 = vmatprep.subr.bf16.mxu0 0
        %1640 = vmatpush1.bf16.xpose.msra.mxu0 0
        %1641 = vmatprep.subr.bf16.mxu0 0
        %1642 = vmatpush1.bf16.xpose.msra.mxu0 0
        %1643 = vmatprep.subr.bf16.mxu0 0
        %1644 = vmatpush1.bf16.xpose.msra.mxu0 0
        %1645 = vmatprep.subr.bf16.mxu0 0
        %1646 = vmatpush1.bf16.xpose.msra.mxu0 0
        %1647 = vmatprep.subr.bf16.mxu0 0
        %1648 = vmatpush1.bf16.xpose.msra.mxu0 0
        %1649 = vmatprep.subr.bf16.mxu0 0
        %1650 = vmatpush1.bf16.xpose.msra.mxu0 0
        %1651 = vmatprep.mubr.bf16.mxu0 0
        %1652 = vmatmul.mubr.bf16.gmra.mrb[0].mxu0 %v1614
        %v1653 = vpop.f32.mrb[0].mxu0
        %v1654 = vadd.f32 0.0, %v1653
        %v1655 = vpop.f32.mrb[0].mxu0
        %v1656 = vpop.f32.mrb[0].mxu0
        %v1657 = vpop.f32.mrb[0].mxu0
        %1658 = vdwg.mxu0
        %v1660 = vsel %vm1520, %v899, 0
        %v1663 = vsel %vm1520, %v1207, 0
        %1665 = vmatprep.subr.bf16.mxu0 0
        %1666 = vmatpush1.bf16.xpose.msra.mxu0 %v1663
        %1667 = vmatprep.subr.bf16.mxu0 0
        %1668 = vmatpush1.bf16.xpose.msra.mxu0 0
        %1669 = vmatprep.subr.bf16.mxu0 0
        %1670 = vmatpush1.bf16.xpose.msra.mxu0 0
        %1671 = vmatprep.subr.bf16.mxu0 0
        %1672 = vmatpush1.bf16.xpose.msra.mxu0 0
        %1673 = vmatprep.subr.bf16.mxu0 0
        %1674 = vmatpush1.bf16.xpose.msra.mxu0 0
        %1675 = vmatprep.subr.bf16.mxu0 0
        %1676 = vmatpush1.bf16.xpose.msra.mxu0 0
        %1677 = vmatprep.subr.bf16.mxu0 0
        %1678 = vmatpush1.bf16.xpose.msra.mxu0 0
        %1679 = vmatprep.subr.bf16.mxu0 0
        %1680 = vmatpush1.bf16.xpose.msra.mxu0 0
        %1681 = vmatprep.subr.bf16.mxu0 0
        %1682 = vmatpush1.bf16.xpose.msra.mxu0 0
        %1683 = vmatprep.subr.bf16.mxu0 0
        %1684 = vmatpush1.bf16.xpose.msra.mxu0 0
        %1685 = vmatprep.subr.bf16.mxu0 0
        %1686 = vmatpush1.bf16.xpose.msra.mxu0 0
        %1687 = vmatprep.subr.bf16.mxu0 0
        %1688 = vmatpush1.bf16.xpose.msra.mxu0 0
        %1689 = vmatprep.subr.bf16.mxu0 0
        %1690 = vmatpush1.bf16.xpose.msra.mxu0 0
        %1691 = vmatprep.subr.bf16.mxu0 0
        %1692 = vmatpush1.bf16.xpose.msra.mxu0 0
        %1693 = vmatprep.subr.bf16.mxu0 0
        %1694 = vmatpush1.bf16.xpose.msra.mxu0 0
        %1695 = vmatprep.subr.bf16.mxu0 0
        %1696 = vmatpush1.bf16.xpose.msra.mxu0 0
        %1697 = vmatprep.mubr.bf16.mxu0 0
        %1698 = vmatmul.mubr.bf16.gmra.mrb[0].mxu0 %v1660
        %v1699 = vpop.f32.mrb[0].mxu0
        %v1700 = vadd.f32 0.0, %v1699
        %v1701 = vpop.f32.mrb[0].mxu0
        %v1702 = vpop.f32.mrb[0].mxu0
        %v1703 = vpop.f32.mrb[0].mxu0
        %1704 = vdwg.mxu0
        %v1706 = vsel %vm1520, %v900, 0
        %v1709 = vsel %vm1520, %v1208, 0
        %1711 = vmatprep.subr.bf16.mxu0 0
        %1712 = vmatpush1.bf16.xpose.msra.mxu0 %v1709
        %1713 = vmatprep.subr.bf16.mxu0 0
        %1714 = vmatpush1.bf16.xpose.msra.mxu0 0
        %1715 = vmatprep.subr.bf16.mxu0 0
        %1716 = vmatpush1.bf16.xpose.msra.mxu0 0
        %1717 = vmatprep.subr.bf16.mxu0 0
        %1718 = vmatpush1.bf16.xpose.msra.mxu0 0
        %1719 = vmatprep.subr.bf16.mxu0 0
        %1720 = vmatpush1.bf16.xpose.msra.mxu0 0
        %1721 = vmatprep.subr.bf16.mxu0 0
        %1722 = vmatpush1.bf16.xpose.msra.mxu0 0
        %1723 = vmatprep.subr.bf16.mxu0 0
        %1724 = vmatpush1.bf16.xpose.msra.mxu0 0
        %1725 = vmatprep.subr.bf16.mxu0 0
        %1726 = vmatpush1.bf16.xpose.msra.mxu0 0
        %1727 = vmatprep.subr.bf16.mxu0 0
        %1728 = vmatpush1.bf16.xpose.msra.mxu0 0
        %1729 = vmatprep.subr.bf16.mxu0 0
        %1730 = vmatpush1.bf16.xpose.msra.mxu0 0
        %1731 = vmatprep.subr.bf16.mxu0 0
        %1732 = vmatpush1.bf16.xpose.msra.mxu0 0
        %1733 = vmatprep.subr.bf16.mxu0 0
        %1734 = vmatpush1.bf16.xpose.msra.mxu0 0
        %1735 = vmatprep.subr.bf16.mxu0 0
        %1736 = vmatpush1.bf16.xpose.msra.mxu0 0
        %1737 = vmatprep.subr.bf16.mxu0 0
        %1738 = vmatpush1.bf16.xpose.msra.mxu0 0
        %1739 = vmatprep.subr.bf16.mxu0 0
        %1740 = vmatpush1.bf16.xpose.msra.mxu0 0
        %1741 = vmatprep.subr.bf16.mxu0 0
        %1742 = vmatpush1.bf16.xpose.msra.mxu0 0
        %1743 = vmatprep.mubr.bf16.mxu0 0
        %1744 = vmatmul.mubr.bf16.gmra.mrb[0].mxu0 %v1706
        %v1745 = vpop.f32.mrb[0].mxu0
        %v1746 = vadd.f32 0.0, %v1745
        %v1747 = vpop.f32.mrb[0].mxu0
        %v1748 = vpop.f32.mrb[0].mxu0
        %v1749 = vpop.f32.mrb[0].mxu0
        %1750 = vdwg.mxu0
        %v1752 = vsel %vm1520, %v901, 0
        %v1755 = vsel %vm1520, %v1209, 0
        %1757 = vmatprep.subr.bf16.mxu0 0
        %1758 = vmatpush1.bf16.xpose.msra.mxu0 %v1755
        %1759 = vmatprep.subr.bf16.mxu0 0
        %1760 = vmatpush1.bf16.xpose.msra.mxu0 0
        %1761 = vmatprep.subr.bf16.mxu0 0
        %1762 = vmatpush1.bf16.xpose.msra.mxu0 0
        %1763 = vmatprep.subr.bf16.mxu0 0
        %1764 = vmatpush1.bf16.xpose.msra.mxu0 0
        %1765 = vmatprep.subr.bf16.mxu0 0
        %1766 = vmatpush1.bf16.xpose.msra.mxu0 0
        %1767 = vmatprep.subr.bf16.mxu0 0
        %1768 = vmatpush1.bf16.xpose.msra.mxu0 0
        %1769 = vmatprep.subr.bf16.mxu0 0
        %1770 = vmatpush1.bf16.xpose.msra.mxu0 0
        %1771 = vmatprep.subr.bf16.mxu0 0
        %1772 = vmatpush1.bf16.xpose.msra.mxu0 0
        %1773 = vmatprep.subr.bf16.mxu0 0
        %1774 = vmatpush1.bf16.xpose.msra.mxu0 0
        %1775 = vmatprep.subr.bf16.mxu0 0
        %1776 = vmatpush1.bf16.xpose.msra.mxu0 0
        %1777 = vmatprep.subr.bf16.mxu0 0
        %1778 = vmatpush1.bf16.xpose.msra.mxu0 0
        %1779 = vmatprep.subr.bf16.mxu0 0
        %1780 = vmatpush1.bf16.xpose.msra.mxu0 0
        %1781 = vmatprep.subr.bf16.mxu0 0
        %1782 = vmatpush1.bf16.xpose.msra.mxu0 0
        %1783 = vmatprep.subr.bf16.mxu0 0
        %1784 = vmatpush1.bf16.xpose.msra.mxu0 0
        %1785 = vmatprep.subr.bf16.mxu0 0
        %1786 = vmatpush1.bf16.xpose.msra.mxu0 0
        %1787 = vmatprep.subr.bf16.mxu0 0
        %1788 = vmatpush1.bf16.xpose.msra.mxu0 0
        %1789 = vmatprep.mubr.bf16.mxu0 0
        %1790 = vmatmul.mubr.bf16.gmra.mrb[0].mxu0 %v1752
        %v1791 = vpop.f32.mrb[0].mxu0
        %v1792 = vadd.f32 0.0, %v1791
        %v1793 = vpop.f32.mrb[0].mxu0
        %v1794 = vpop.f32.mrb[0].mxu0
        %v1795 = vpop.f32.mrb[0].mxu0
        %1796 = vdwg.mxu0
        %v1798 = vsel %vm1520, %v902, 0
        %v1801 = vsel %vm1520, %v1210, 0
        %1803 = vmatprep.subr.bf16.mxu0 0
        %1804 = vmatpush1.bf16.xpose.msra.mxu0 %v1801
        %1805 = vmatprep.subr.bf16.mxu0 0
        %1806 = vmatpush1.bf16.xpose.msra.mxu0 0
        %1807 = vmatprep.subr.bf16.mxu0 0
        %1808 = vmatpush1.bf16.xpose.msra.mxu0 0
        %1809 = vmatprep.subr.bf16.mxu0 0
        %1810 = vmatpush1.bf16.xpose.msra.mxu0 0
        %1811 = vmatprep.subr.bf16.mxu0 0
        %1812 = vmatpush1.bf16.xpose.msra.mxu0 0
        %1813 = vmatprep.subr.bf16.mxu0 0
        %1814 = vmatpush1.bf16.xpose.msra.mxu0 0
        %1815 = vmatprep.subr.bf16.mxu0 0
        %1816 = vmatpush1.bf16.xpose.msra.mxu0 0
        %1817 = vmatprep.subr.bf16.mxu0 0
        %1818 = vmatpush1.bf16.xpose.msra.mxu0 0
        %1819 = vmatprep.subr.bf16.mxu0 0
        %1820 = vmatpush1.bf16.xpose.msra.mxu0 0
        %1821 = vmatprep.subr.bf16.mxu0 0
        %1822 = vmatpush1.bf16.xpose.msra.mxu0 0
        %1823 = vmatprep.subr.bf16.mxu0 0
        %1824 = vmatpush1.bf16.xpose.msra.mxu0 0
        %1825 = vmatprep.subr.bf16.mxu0 0
        %1826 = vmatpush1.bf16.xpose.msra.mxu0 0
        %1827 = vmatprep.subr.bf16.mxu0 0
        %1828 = vmatpush1.bf16.xpose.msra.mxu0 0
        %1829 = vmatprep.subr.bf16.mxu0 0
        %1830 = vmatpush1.bf16.xpose.msra.mxu0 0
        %1831 = vmatprep.subr.bf16.mxu0 0
        %1832 = vmatpush1.bf16.xpose.msra.mxu0 0
        %1833 = vmatprep.subr.bf16.mxu0 0
        %1834 = vmatpush1.bf16.xpose.msra.mxu0 0
        %1835 = vmatprep.mubr.bf16.mxu0 0
        %1836 = vmatmul.mubr.bf16.gmra.mrb[0].mxu0 %v1798
        %v1837 = vpop.f32.mrb[0].mxu0
        %v1838 = vadd.f32 0.0, %v1837
        %v1839 = vpop.f32.mrb[0].mxu0
        %v1840 = vpop.f32.mrb[0].mxu0
        %v1841 = vpop.f32.mrb[0].mxu0
        %1842 = vdwg.mxu0
        %v1844 = vsel %vm1520, %v903, 0
        %v1847 = vsel %vm1520, %v1211, 0
        %1849 = vmatprep.subr.bf16.mxu0 0
        %1850 = vmatpush1.bf16.xpose.msra.mxu0 %v1847
        %1851 = vmatprep.subr.bf16.mxu0 0
        %1852 = vmatpush1.bf16.xpose.msra.mxu0 0
        %1853 = vmatprep.subr.bf16.mxu0 0
        %1854 = vmatpush1.bf16.xpose.msra.mxu0 0
        %1855 = vmatprep.subr.bf16.mxu0 0
        %1856 = vmatpush1.bf16.xpose.msra.mxu0 0
        %1857 = vmatprep.subr.bf16.mxu0 0
        %1858 = vmatpush1.bf16.xpose.msra.mxu0 0
        %1859 = vmatprep.subr.bf16.mxu0 0
        %1860 = vmatpush1.bf16.xpose.msra.mxu0 0
        %1861 = vmatprep.subr.bf16.mxu0 0
        %1862 = vmatpush1.bf16.xpose.msra.mxu0 0
        %1863 = vmatprep.subr.bf16.mxu0 0
        %1864 = vmatpush1.bf16.xpose.msra.mxu0 0
        %1865 = vmatprep.subr.bf16.mxu0 0
        %1866 = vmatpush1.bf16.xpose.msra.mxu0 0
        %1867 = vmatprep.subr.bf16.mxu0 0
        %1868 = vmatpush1.bf16.xpose.msra.mxu0 0
        %1869 = vmatprep.subr.bf16.mxu0 0
        %1870 = vmatpush1.bf16.xpose.msra.mxu0 0
        %1871 = vmatprep.subr.bf16.mxu0 0
        %1872 = vmatpush1.bf16.xpose.msra.mxu0 0
        %1873 = vmatprep.subr.bf16.mxu0 0
        %1874 = vmatpush1.bf16.xpose.msra.mxu0 0
        %1875 = vmatprep.subr.bf16.mxu0 0
        %1876 = vmatpush1.bf16.xpose.msra.mxu0 0
        %1877 = vmatprep.subr.bf16.mxu0 0
        %1878 = vmatpush1.bf16.xpose.msra.mxu0 0
        %1879 = vmatprep.subr.bf16.mxu0 0
        %1880 = vmatpush1.bf16.xpose.msra.mxu0 0
        %1881 = vmatprep.mubr.bf16.mxu0 0
        %1882 = vmatmul.mubr.bf16.gmra.mrb[0].mxu0 %v1844
        %v1883 = vpop.f32.mrb[0].mxu0
        %v1884 = vadd.f32 0.0, %v1883
        %v1885 = vpop.f32.mrb[0].mxu0
        %v1886 = vpop.f32.mrb[0].mxu0
        %v1887 = vpop.f32.mrb[0].mxu0
        %1888 = vdwg.mxu0
        %v1889 = vmul.f32 %v1562, 0.25
        %v1890 = vmul.f32 %v1608, 0.25
        %v1891 = vmul.f32 %v1654, 0.25
        %v1892 = vmul.f32 %v1700, 0.25
        %v1893 = vmul.f32 %v1746, 0.25
        %v1894 = vmul.f32 %v1792, 0.25
        %v1895 = vmul.f32 %v1838, 0.25
        %v1896 = vmul.f32 %v1884, 0.25
        %vm1897 = vcmask 64512
        %v1898 = vsel %vm1897, %v1889, -inf
        %1899 = vmax.xlane.f32.xlu0 %v1898
        %v1900 = vpop.xlane.xlu0 %1899
        %v1901 = vsel %vm1897, %v1890, -inf
        %1902 = vmax.xlane.f32.xlu0 %v1901
        %v1903 = vpop.xlane.xlu0 %1902
        %v1904 = vsel %vm1897, %v1891, -inf
        %1905 = vmax.xlane.f32.xlu0 %v1904
        %v1906 = vpop.xlane.xlu0 %1905
        %v1907 = vsel %vm1897, %v1892, -inf
        %1908 = vmax.xlane.f32.xlu0 %v1907
        %v1909 = vpop.xlane.xlu0 %1908
        %v1910 = vsel %vm1897, %v1893, -inf
        %1911 = vmax.xlane.f32.xlu0 %v1910
        %v1912 = vpop.xlane.xlu0 %1911
        %v1913 = vsel %vm1897, %v1894, -inf
        %1914 = vmax.xlane.f32.xlu0 %v1913
        %v1915 = vpop.xlane.xlu0 %1914
        %v1916 = vsel %vm1897, %v1895, -inf
        %1917 = vmax.xlane.f32.xlu0 %v1916
        %v1918 = vpop.xlane.xlu0 %1917
        %v1919 = vsel %vm1897, %v1896, -inf
        %1920 = vmax.xlane.f32.xlu0 %v1919
        %v1921 = vpop.xlane.xlu0 %1920
        %v1922 = vsub.f32 %v1889, %v1900
        %v1923 = vsub.f32 %v1890, %v1903
        %v1924 = vsub.f32 %v1891, %v1906
        %v1925 = vsub.f32 %v1892, %v1909
        %v1926 = vsub.f32 %v1893, %v1912
        %v1927 = vsub.f32 %v1894, %v1915
        %v1928 = vsub.f32 %v1895, %v1918
        %v1929 = vsub.f32 %v1896, %v1921
        %v1930 = vmul.f32 %v1922, 1.442695
        %v1931 = vpow.pop %v1930
        %v1932 = vmul.f32 %v1923, 1.442695
        %v1933 = vpow.pop %v1932
        %v1934 = vmul.f32 %v1924, 1.442695
        %v1935 = vpow.pop %v1934
        %v1936 = vmul.f32 %v1925, 1.442695
        %v1937 = vpow.pop %v1936
        %v1938 = vmul.f32 %v1926, 1.442695
        %v1939 = vpow.pop %v1938
        %v1940 = vmul.f32 %v1927, 1.442695
        %v1941 = vpow.pop %v1940
        %v1942 = vmul.f32 %v1928, 1.442695
        %v1943 = vpow.pop %v1942
        %v1944 = vmul.f32 %v1929, 1.442695
        %v1945 = vpow.pop %v1944
        %v1946 = vsel %vm1897, %v1931, 0.0
        %1947 = vadd.xlane.f32.xlu0 %v1946
        %v1948 = vpop.xlane.xlu0 %1947
        %v1949 = vsel %vm1897, %v1933, 0.0
        %1950 = vadd.xlane.f32.xlu0 %v1949
        %v1951 = vpop.xlane.xlu0 %1950
        %v1952 = vsel %vm1897, %v1935, 0.0
        %1953 = vadd.xlane.f32.xlu0 %v1952
        %v1954 = vpop.xlane.xlu0 %1953
        %v1955 = vsel %vm1897, %v1937, 0.0
        %1956 = vadd.xlane.f32.xlu0 %v1955
        %v1957 = vpop.xlane.xlu0 %1956
        %v1958 = vsel %vm1897, %v1939, 0.0
        %1959 = vadd.xlane.f32.xlu0 %v1958
        %v1960 = vpop.xlane.xlu0 %1959
        %v1961 = vsel %vm1897, %v1941, 0.0
        %1962 = vadd.xlane.f32.xlu0 %v1961
        %v1963 = vpop.xlane.xlu0 %1962
        %v1964 = vsel %vm1897, %v1943, 0.0
        %1965 = vadd.xlane.f32.xlu0 %v1964
        %v1966 = vpop.xlane.xlu0 %1965
        %v1967 = vsel %vm1897, %v1945, 0.0
        %1968 = vadd.xlane.f32.xlu0 %v1967
        %v1969 = vpop.xlane.xlu0 %1968
        %v1970 = vrcp.pop %v1948
        %v1971 = vrcp.pop %v1951
        %v1972 = vrcp.pop %v1954
        %v1973 = vrcp.pop %v1957
        %v1974 = vrcp.pop %v1960
        %v1975 = vrcp.pop %v1963
        %v1976 = vrcp.pop %v1966
        %v1977 = vrcp.pop %v1969
        %v1978 = vmul.f32 %v1931, %v1970
        %v1979 = vmul.f32 %v1933, %v1971
        %v1980 = vmul.f32 %v1935, %v1972
        %v1981 = vmul.f32 %v1937, %v1973
        %v1982 = vmul.f32 %v1939, %v1974
        %v1983 = vmul.f32 %v1941, %v1975
        %v1984 = vmul.f32 %v1943, %v1976
        %v1985 = vmul.f32 %v1945, %v1977
        %v1986 = vpack.c.bf16 %v1978, %v1978
        %v1987 = vpack.c.bf16 %v1979, %v1979
        %v1988 = vpack.c.bf16 %v1980, %v1980
        %v1989 = vpack.c.bf16 %v1981, %v1981
        %v1990 = vpack.c.bf16 %v1982, %v1982
        %v1991 = vpack.c.bf16 %v1983, %v1983
        %v1992 = vpack.c.bf16 %v1984, %v1984
        %v1993 = vpack.c.bf16 %v1985, %v1985
        %v1995 = vsel %vm1897, %v1986, 0
        %vm1997 = vcmask 1043456
        %v1999 = vsel %vm1997, %v1512, 0
        %2001 = vmatprep.subr.bf16.mxu0 0
        %2002 = vmatpush1.bf16.msra.mxu0 %v1999
        %2003 = vmatprep.subr.bf16.mxu0 0
        %2004 = vmatpush1.bf16.msra.mxu0 0
        %2005 = vmatprep.subr.bf16.mxu0 0
        %2006 = vmatpush1.bf16.msra.mxu0 0
        %2007 = vmatprep.subr.bf16.mxu0 0
        %2008 = vmatpush1.bf16.msra.mxu0 0
        %2009 = vmatprep.subr.bf16.mxu0 0
        %2010 = vmatpush1.bf16.msra.mxu0 0
        %2011 = vmatprep.subr.bf16.mxu0 0
        %2012 = vmatpush1.bf16.msra.mxu0 0
        %2013 = vmatprep.subr.bf16.mxu0 0
        %2014 = vmatpush1.bf16.msra.mxu0 0
        %2015 = vmatprep.subr.bf16.mxu0 0
        %2016 = vmatpush1.bf16.msra.mxu0 0
        %2017 = vmatprep.subr.bf16.mxu0 0
        %2018 = vmatpush1.bf16.msra.mxu0 0
        %2019 = vmatprep.subr.bf16.mxu0 0
        %2020 = vmatpush1.bf16.msra.mxu0 0
        %2021 = vmatprep.subr.bf16.mxu0 0
        %2022 = vmatpush1.bf16.msra.mxu0 0
        %2023 = vmatprep.subr.bf16.mxu0 0
        %2024 = vmatpush1.bf16.msra.mxu0 0
        %2025 = vmatprep.subr.bf16.mxu0 0
        %2026 = vmatpush1.bf16.msra.mxu0 0
        %2027 = vmatprep.subr.bf16.mxu0 0
        %2028 = vmatpush1.bf16.msra.mxu0 0
        %2029 = vmatprep.subr.bf16.mxu0 0
        %2030 = vmatpush1.bf16.msra.mxu0 0
        %2031 = vmatprep.subr.bf16.mxu0 0
        %2032 = vmatpush1.bf16.msra.mxu0 0
        %2033 = vmatprep.mubr.bf16.mxu0 0
        %2034 = vmatmul.mubr.bf16.gmra.mrb[0].mxu0 %v1995
        %v2035 = vpop.f32.mrb[0].mxu0
        %v2036 = vadd.f32 0.0, %v2035
        %v2037 = vpop.f32.mrb[0].mxu0
        %v2038 = vpop.f32.mrb[0].mxu0
        %v2039 = vpop.f32.mrb[0].mxu0
        %2040 = vdwg.mxu0
        %v2042 = vsel %vm1897, %v1987, 0
        %v2045 = vsel %vm1997, %v1513, 0
        %2047 = vmatprep.subr.bf16.mxu0 0
        %2048 = vmatpush1.bf16.msra.mxu0 %v2045
        %2049 = vmatprep.subr.bf16.mxu0 0
        %2050 = vmatpush1.bf16.msra.mxu0 0
        %2051 = vmatprep.subr.bf16.mxu0 0
        %2052 = vmatpush1.bf16.msra.mxu0 0
        %2053 = vmatprep.subr.bf16.mxu0 0
        %2054 = vmatpush1.bf16.msra.mxu0 0
        %2055 = vmatprep.subr.bf16.mxu0 0
        %2056 = vmatpush1.bf16.msra.mxu0 0
        %2057 = vmatprep.subr.bf16.mxu0 0
        %2058 = vmatpush1.bf16.msra.mxu0 0
        %2059 = vmatprep.subr.bf16.mxu0 0
        %2060 = vmatpush1.bf16.msra.mxu0 0
        %2061 = vmatprep.subr.bf16.mxu0 0
        %2062 = vmatpush1.bf16.msra.mxu0 0
        %2063 = vmatprep.subr.bf16.mxu0 0
        %2064 = vmatpush1.bf16.msra.mxu0 0
        %2065 = vmatprep.subr.bf16.mxu0 0
        %2066 = vmatpush1.bf16.msra.mxu0 0
        %2067 = vmatprep.subr.bf16.mxu0 0
        %2068 = vmatpush1.bf16.msra.mxu0 0
        %2069 = vmatprep.subr.bf16.mxu0 0
        %2070 = vmatpush1.bf16.msra.mxu0 0
        %2071 = vmatprep.subr.bf16.mxu0 0
        %2072 = vmatpush1.bf16.msra.mxu0 0
        %2073 = vmatprep.subr.bf16.mxu0 0
        %2074 = vmatpush1.bf16.msra.mxu0 0
        %2075 = vmatprep.subr.bf16.mxu0 0
        %2076 = vmatpush1.bf16.msra.mxu0 0
        %2077 = vmatprep.subr.bf16.mxu0 0
        %2078 = vmatpush1.bf16.msra.mxu0 0
        %2079 = vmatprep.mubr.bf16.mxu0 0
        %2080 = vmatmul.mubr.bf16.gmra.mrb[0].mxu0 %v2042
        %v2081 = vpop.f32.mrb[0].mxu0
        %v2082 = vadd.f32 0.0, %v2081
        %v2083 = vpop.f32.mrb[0].mxu0
        %v2084 = vpop.f32.mrb[0].mxu0
        %v2085 = vpop.f32.mrb[0].mxu0
        %2086 = vdwg.mxu0
        %v2088 = vsel %vm1897, %v1988, 0
        %v2091 = vsel %vm1997, %v1514, 0
        %2093 = vmatprep.subr.bf16.mxu0 0
        %2094 = vmatpush1.bf16.msra.mxu0 %v2091
        %2095 = vmatprep.subr.bf16.mxu0 0
        %2096 = vmatpush1.bf16.msra.mxu0 0
        %2097 = vmatprep.subr.bf16.mxu0 0
        %2098 = vmatpush1.bf16.msra.mxu0 0
        %2099 = vmatprep.subr.bf16.mxu0 0
        %2100 = vmatpush1.bf16.msra.mxu0 0
        %2101 = vmatprep.subr.bf16.mxu0 0
        %2102 = vmatpush1.bf16.msra.mxu0 0
        %2103 = vmatprep.subr.bf16.mxu0 0
        %2104 = vmatpush1.bf16.msra.mxu0 0
        %2105 = vmatprep.subr.bf16.mxu0 0
        %2106 = vmatpush1.bf16.msra.mxu0 0
        %2107 = vmatprep.subr.bf16.mxu0 0
        %2108 = vmatpush1.bf16.msra.mxu0 0
        %2109 = vmatprep.subr.bf16.mxu0 0
        %2110 = vmatpush1.bf16.msra.mxu0 0
        %2111 = vmatprep.subr.bf16.mxu0 0
        %2112 = vmatpush1.bf16.msra.mxu0 0
        %2113 = vmatprep.subr.bf16.mxu0 0
        %2114 = vmatpush1.bf16.msra.mxu0 0
        %2115 = vmatprep.subr.bf16.mxu0 0
        %2116 = vmatpush1.bf16.msra.mxu0 0
        %2117 = vmatprep.subr.bf16.mxu0 0
        %2118 = vmatpush1.bf16.msra.mxu0 0
        %2119 = vmatprep.subr.bf16.mxu0 0
        %2120 = vmatpush1.bf16.msra.mxu0 0
        %2121 = vmatprep.subr.bf16.mxu0 0
        %2122 = vmatpush1.bf16.msra.mxu0 0
        %2123 = vmatprep.subr.bf16.mxu0 0
        %2124 = vmatpush1.bf16.msra.mxu0 0
        %2125 = vmatprep.mubr.bf16.mxu0 0
        %2126 = vmatmul.mubr.bf16.gmra.mrb[0].mxu0 %v2088
        %v2127 = vpop.f32.mrb[0].mxu0
        %v2128 = vadd.f32 0.0, %v2127
        %v2129 = vpop.f32.mrb[0].mxu0
        %v2130 = vpop.f32.mrb[0].mxu0
        %v2131 = vpop.f32.mrb[0].mxu0
        %2132 = vdwg.mxu0
        %v2134 = vsel %vm1897, %v1989, 0
        %v2137 = vsel %vm1997, %v1515, 0
        %2139 = vmatprep.subr.bf16.mxu0 0
        %2140 = vmatpush1.bf16.msra.mxu0 %v2137
        %2141 = vmatprep.subr.bf16.mxu0 0
        %2142 = vmatpush1.bf16.msra.mxu0 0
        %2143 = vmatprep.subr.bf16.mxu0 0
        %2144 = vmatpush1.bf16.msra.mxu0 0
        %2145 = vmatprep.subr.bf16.mxu0 0
        %2146 = vmatpush1.bf16.msra.mxu0 0
        %2147 = vmatprep.subr.bf16.mxu0 0
        %2148 = vmatpush1.bf16.msra.mxu0 0
        %2149 = vmatprep.subr.bf16.mxu0 0
        %2150 = vmatpush1.bf16.msra.mxu0 0
        %2151 = vmatprep.subr.bf16.mxu0 0
        %2152 = vmatpush1.bf16.msra.mxu0 0
        %2153 = vmatprep.subr.bf16.mxu0 0
        %2154 = vmatpush1.bf16.msra.mxu0 0
        %2155 = vmatprep.subr.bf16.mxu0 0
        %2156 = vmatpush1.bf16.msra.mxu0 0
        %2157 = vmatprep.subr.bf16.mxu0 0
        %2158 = vmatpush1.bf16.msra.mxu0 0
        %2159 = vmatprep.subr.bf16.mxu0 0
        %2160 = vmatpush1.bf16.msra.mxu0 0
        %2161 = vmatprep.subr.bf16.mxu0 0
        %2162 = vmatpush1.bf16.msra.mxu0 0
        %2163 = vmatprep.subr.bf16.mxu0 0
        %2164 = vmatpush1.bf16.msra.mxu0 0
        %2165 = vmatprep.subr.bf16.mxu0 0
        %2166 = vmatpush1.bf16.msra.mxu0 0
        %2167 = vmatprep.subr.bf16.mxu0 0
        %2168 = vmatpush1.bf16.msra.mxu0 0
        %2169 = vmatprep.subr.bf16.mxu0 0
        %2170 = vmatpush1.bf16.msra.mxu0 0
        %2171 = vmatprep.mubr.bf16.mxu0 0
        %2172 = vmatmul.mubr.bf16.gmra.mrb[0].mxu0 %v2134
        %v2173 = vpop.f32.mrb[0].mxu0
        %v2174 = vadd.f32 0.0, %v2173
        %v2175 = vpop.f32.mrb[0].mxu0
        %v2176 = vpop.f32.mrb[0].mxu0
        %v2177 = vpop.f32.mrb[0].mxu0
        %2178 = vdwg.mxu0
        %v2180 = vsel %vm1897, %v1990, 0
        %v2183 = vsel %vm1997, %v1516, 0
        %2185 = vmatprep.subr.bf16.mxu0 0
        %2186 = vmatpush1.bf16.msra.mxu0 %v2183
        %2187 = vmatprep.subr.bf16.mxu0 0
        %2188 = vmatpush1.bf16.msra.mxu0 0
        %2189 = vmatprep.subr.bf16.mxu0 0
        %2190 = vmatpush1.bf16.msra.mxu0 0
        %2191 = vmatprep.subr.bf16.mxu0 0
        %2192 = vmatpush1.bf16.msra.mxu0 0
        %2193 = vmatprep.subr.bf16.mxu0 0
        %2194 = vmatpush1.bf16.msra.mxu0 0
        %2195 = vmatprep.subr.bf16.mxu0 0
        %2196 = vmatpush1.bf16.msra.mxu0 0
        %2197 = vmatprep.subr.bf16.mxu0 0
        %2198 = vmatpush1.bf16.msra.mxu0 0
        %2199 = vmatprep.subr.bf16.mxu0 0
        %2200 = vmatpush1.bf16.msra.mxu0 0
        %2201 = vmatprep.subr.bf16.mxu0 0
        %2202 = vmatpush1.bf16.msra.mxu0 0
        %2203 = vmatprep.subr.bf16.mxu0 0
        %2204 = vmatpush1.bf16.msra.mxu0 0
        %2205 = vmatprep.subr.bf16.mxu0 0
        %2206 = vmatpush1.bf16.msra.mxu0 0
        %2207 = vmatprep.subr.bf16.mxu0 0
        %2208 = vmatpush1.bf16.msra.mxu0 0
        %2209 = vmatprep.subr.bf16.mxu0 0
        %2210 = vmatpush1.bf16.msra.mxu0 0
        %2211 = vmatprep.subr.bf16.mxu0 0
        %2212 = vmatpush1.bf16.msra.mxu0 0
        %2213 = vmatprep.subr.bf16.mxu0 0
        %2214 = vmatpush1.bf16.msra.mxu0 0
        %2215 = vmatprep.subr.bf16.mxu0 0
        %2216 = vmatpush1.bf16.msra.mxu0 0
        %2217 = vmatprep.mubr.bf16.mxu0 0
        %2218 = vmatmul.mubr.bf16.gmra.mrb[0].mxu0 %v2180
        %v2219 = vpop.f32.mrb[0].mxu0
        %v2220 = vadd.f32 0.0, %v2219
        %v2221 = vpop.f32.mrb[0].mxu0
        %v2222 = vpop.f32.mrb[0].mxu0
        %v2223 = vpop.f32.mrb[0].mxu0
        %2224 = vdwg.mxu0
        %v2226 = vsel %vm1897, %v1991, 0
        %v2229 = vsel %vm1997, %v1517, 0
        %2231 = vmatprep.subr.bf16.mxu0 0
        %2232 = vmatpush1.bf16.msra.mxu0 %v2229
        %2233 = vmatprep.subr.bf16.mxu0 0
        %2234 = vmatpush1.bf16.msra.mxu0 0
        %2235 = vmatprep.subr.bf16.mxu0 0
        %2236 = vmatpush1.bf16.msra.mxu0 0
        %2237 = vmatprep.subr.bf16.mxu0 0
        %2238 = vmatpush1.bf16.msra.mxu0 0
        %2239 = vmatprep.subr.bf16.mxu0 0
        %2240 = vmatpush1.bf16.msra.mxu0 0
        %2241 = vmatprep.subr.bf16.mxu0 0
        %2242 = vmatpush1.bf16.msra.mxu0 0
        %2243 = vmatprep.subr.bf16.mxu0 0
        %2244 = vmatpush1.bf16.msra.mxu0 0
        %2245 = vmatprep.subr.bf16.mxu0 0
        %2246 = vmatpush1.bf16.msra.mxu0 0
        %2247 = vmatprep.subr.bf16.mxu0 0
        %2248 = vmatpush1.bf16.msra.mxu0 0
        %2249 = vmatprep.subr.bf16.mxu0 0
        %2250 = vmatpush1.bf16.msra.mxu0 0
        %2251 = vmatprep.subr.bf16.mxu0 0
        %2252 = vmatpush1.bf16.msra.mxu0 0
        %2253 = vmatprep.subr.bf16.mxu0 0
        %2254 = vmatpush1.bf16.msra.mxu0 0
        %2255 = vmatprep.subr.bf16.mxu0 0
        %2256 = vmatpush1.bf16.msra.mxu0 0
        %2257 = vmatprep.subr.bf16.mxu0 0
        %2258 = vmatpush1.bf16.msra.mxu0 0
        %2259 = vmatprep.subr.bf16.mxu0 0
        %2260 = vmatpush1.bf16.msra.mxu0 0
        %2261 = vmatprep.subr.bf16.mxu0 0
        %2262 = vmatpush1.bf16.msra.mxu0 0
        %2263 = vmatprep.mubr.bf16.mxu0 0
        %2264 = vmatmul.mubr.bf16.gmra.mrb[0].mxu0 %v2226
        %v2265 = vpop.f32.mrb[0].mxu0
        %v2266 = vadd.f32 0.0, %v2265
        %v2267 = vpop.f32.mrb[0].mxu0
        %v2268 = vpop.f32.mrb[0].mxu0
        %v2269 = vpop.f32.mrb[0].mxu0
        %2270 = vdwg.mxu0
        %v2272 = vsel %vm1897, %v1992, 0
        %v2275 = vsel %vm1997, %v1518, 0
        %2277 = vmatprep.subr.bf16.mxu0 0
        %2278 = vmatpush1.bf16.msra.mxu0 %v2275
        %2279 = vmatprep.subr.bf16.mxu0 0
        %2280 = vmatpush1.bf16.msra.mxu0 0
        %2281 = vmatprep.subr.bf16.mxu0 0
        %2282 = vmatpush1.bf16.msra.mxu0 0
        %2283 = vmatprep.subr.bf16.mxu0 0
        %2284 = vmatpush1.bf16.msra.mxu0 0
        %2285 = vmatprep.subr.bf16.mxu0 0
        %2286 = vmatpush1.bf16.msra.mxu0 0
        %2287 = vmatprep.subr.bf16.mxu0 0
        %2288 = vmatpush1.bf16.msra.mxu0 0
        %2289 = vmatprep.subr.bf16.mxu0 0
        %2290 = vmatpush1.bf16.msra.mxu0 0
        %2291 = vmatprep.subr.bf16.mxu0 0
        %2292 = vmatpush1.bf16.msra.mxu0 0
        %2293 = vmatprep.subr.bf16.mxu0 0
        %2294 = vmatpush1.bf16.msra.mxu0 0
        %2295 = vmatprep.subr.bf16.mxu0 0
        %2296 = vmatpush1.bf16.msra.mxu0 0
        %2297 = vmatprep.subr.bf16.mxu0 0
        %2298 = vmatpush1.bf16.msra.mxu0 0
        %2299 = vmatprep.subr.bf16.mxu0 0
        %2300 = vmatpush1.bf16.msra.mxu0 0
        %2301 = vmatprep.subr.bf16.mxu0 0
        %2302 = vmatpush1.bf16.msra.mxu0 0
        %2303 = vmatprep.subr.bf16.mxu0 0
        %2304 = vmatpush1.bf16.msra.mxu0 0
        %2305 = vmatprep.subr.bf16.mxu0 0
        %2306 = vmatpush1.bf16.msra.mxu0 0
        %2307 = vmatprep.subr.bf16.mxu0 0
        %2308 = vmatpush1.bf16.msra.mxu0 0
        %2309 = vmatprep.mubr.bf16.mxu0 0
        %2310 = vmatmul.mubr.bf16.gmra.mrb[0].mxu0 %v2272
        %v2311 = vpop.f32.mrb[0].mxu0
        %v2312 = vadd.f32 0.0, %v2311
        %v2313 = vpop.f32.mrb[0].mxu0
        %v2314 = vpop.f32.mrb[0].mxu0
        %v2315 = vpop.f32.mrb[0].mxu0
        %2316 = vdwg.mxu0
        %v2318 = vsel %vm1897, %v1993, 0
        %v2321 = vsel %vm1997, %v1519, 0
        %2323 = vmatprep.subr.bf16.mxu0 0
        %2324 = vmatpush1.bf16.msra.mxu0 %v2321
        %2325 = vmatprep.subr.bf16.mxu0 0
        %2326 = vmatpush1.bf16.msra.mxu0 0
        %2327 = vmatprep.subr.bf16.mxu0 0
        %2328 = vmatpush1.bf16.msra.mxu0 0
        %2329 = vmatprep.subr.bf16.mxu0 0
        %2330 = vmatpush1.bf16.msra.mxu0 0
        %2331 = vmatprep.subr.bf16.mxu0 0
        %2332 = vmatpush1.bf16.msra.mxu0 0
        %2333 = vmatprep.subr.bf16.mxu0 0
        %2334 = vmatpush1.bf16.msra.mxu0 0
        %2335 = vmatprep.subr.bf16.mxu0 0
        %2336 = vmatpush1.bf16.msra.mxu0 0
        %2337 = vmatprep.subr.bf16.mxu0 0
        %2338 = vmatpush1.bf16.msra.mxu0 0
        %2339 = vmatprep.subr.bf16.mxu0 0
        %2340 = vmatpush1.bf16.msra.mxu0 0
        %2341 = vmatprep.subr.bf16.mxu0 0
        %2342 = vmatpush1.bf16.msra.mxu0 0
        %2343 = vmatprep.subr.bf16.mxu0 0
        %2344 = vmatpush1.bf16.msra.mxu0 0
        %2345 = vmatprep.subr.bf16.mxu0 0
        %2346 = vmatpush1.bf16.msra.mxu0 0
        %2347 = vmatprep.subr.bf16.mxu0 0
        %2348 = vmatpush1.bf16.msra.mxu0 0
        %2349 = vmatprep.subr.bf16.mxu0 0
        %2350 = vmatpush1.bf16.msra.mxu0 0
        %2351 = vmatprep.subr.bf16.mxu0 0
        %2352 = vmatpush1.bf16.msra.mxu0 0
        %2353 = vmatprep.subr.bf16.mxu0 0
        %2354 = vmatpush1.bf16.msra.mxu0 0
        %2355 = vmatprep.mubr.bf16.mxu0 0
        %2356 = vmatmul.mubr.bf16.gmra.mrb[0].mxu0 %v2318
        %v2357 = vpop.f32.mrb[0].mxu0
        %v2358 = vadd.f32 0.0, %v2357
        %v2359 = vpop.f32.mrb[0].mxu0
        %v2360 = vpop.f32.mrb[0].mxu0
        %v2361 = vpop.f32.mrb[0].mxu0
        %2362 = vdwg.mxu0
        %v2363 = vcombine.low %v2036, %v2128
        %v2364 = vcombine.high %v2036, %v2128
        %v2366 = vunpack.c.l.s4 1983009808
        %v2367 = vunpack.c.0.s8 %v2366
        %v2368 = vlaneseq
        %v2369 = vshrl.u32 %v2368, 7
        %v2370 = vsub.s32 %v2367, %v2369
        %v2371 = vrot.slane %v2363, %v2370
        %v2373 = vunpack.c.l.s4 1983009808
        %v2374 = vunpack.c.0.s8 %v2373
        %v2375 = vlaneseq
        %v2376 = vshrl.u32 %v2375, 7
        %v2377 = vsub.s32 %v2374, %v2376
        %v2378 = vrot.slane %v2364, %v2377
        %v2379 = vcombine.low %v2082, %v2174
        %v2380 = vcombine.high %v2082, %v2174
        %v2382 = vunpack.c.l.s4 1983009808
        %v2383 = vunpack.c.0.s8 %v2382
        %v2384 = vlaneseq
        %v2385 = vshrl.u32 %v2384, 7
        %v2386 = vsub.s32 %v2383, %v2385
        %v2387 = vrot.slane %v2379, %v2386
        %v2389 = vunpack.c.l.s4 1983009808
        %v2390 = vunpack.c.0.s8 %v2389
        %v2391 = vlaneseq
        %v2392 = vshrl.u32 %v2391, 7
        %v2393 = vsub.s32 %v2390, %v2392
        %v2394 = vrot.slane %v2380, %v2393
        %v2395 = vcombine.low %v2220, %v2312
        %v2396 = vcombine.high %v2220, %v2312
        %v2398 = vunpack.c.l.s4 1983009808
        %v2399 = vunpack.c.0.s8 %v2398
        %v2400 = vlaneseq
        %v2401 = vshrl.u32 %v2400, 7
        %v2402 = vsub.s32 %v2399, %v2401
        %v2403 = vrot.slane %v2395, %v2402
        %v2405 = vunpack.c.l.s4 1983009808
        %v2406 = vunpack.c.0.s8 %v2405
        %v2407 = vlaneseq
        %v2408 = vshrl.u32 %v2407, 7
        %v2409 = vsub.s32 %v2406, %v2408
        %v2410 = vrot.slane %v2396, %v2409
        %v2411 = vcombine.low %v2266, %v2358
        %v2412 = vcombine.high %v2266, %v2358
        %v2414 = vunpack.c.l.s4 1983009808
        %v2415 = vunpack.c.0.s8 %v2414
        %v2416 = vlaneseq
        %v2417 = vshrl.u32 %v2416, 7
        %v2418 = vsub.s32 %v2415, %v2417
        %v2419 = vrot.slane %v2411, %v2418
        %v2421 = vunpack.c.l.s4 1983009808
        %v2422 = vunpack.c.0.s8 %v2421
        %v2423 = vlaneseq
        %v2424 = vshrl.u32 %v2423, 7
        %v2425 = vsub.s32 %v2422, %v2424
        %v2426 = vrot.slane %v2412, %v2425
        %v2427 = vcombine.low %v2371, %v2387
        %v2428 = vcombine.high %v2371, %v2387
        %v2430 = vunpack.c.l.s4 1934713408
        %v2431 = vunpack.c.0.s8 %v2430
        %v2432 = vlaneseq
        %v2433 = vshrl.u32 %v2432, 7
        %v2434 = vsub.s32 %v2431, %v2433
        %v2435 = vrot.slane %v2427, %v2434
        %v2437 = vunpack.c.l.s4 1934713408
        %v2438 = vunpack.c.0.s8 %v2437
        %v2439 = vlaneseq
        %v2440 = vshrl.u32 %v2439, 7
        %v2441 = vsub.s32 %v2438, %v2440
        %v2442 = vrot.slane %v2428, %v2441
        %v2443 = vcombine.low %v2378, %v2394
        %v2444 = vcombine.high %v2378, %v2394
        %v2446 = vunpack.c.l.s4 1934713408
        %v2447 = vunpack.c.0.s8 %v2446
        %v2448 = vlaneseq
        %v2449 = vshrl.u32 %v2448, 7
        %v2450 = vsub.s32 %v2447, %v2449
        %v2451 = vrot.slane %v2443, %v2450
        %v2453 = vunpack.c.l.s4 1934713408
        %v2454 = vunpack.c.0.s8 %v2453
        %v2455 = vlaneseq
        %v2456 = vshrl.u32 %v2455, 7
        %v2457 = vsub.s32 %v2454, %v2456
        %v2458 = vrot.slane %v2444, %v2457
        %v2459 = vcombine.low %v2403, %v2419
        %v2460 = vcombine.high %v2403, %v2419
        %v2462 = vunpack.c.l.s4 1934713408
        %v2463 = vunpack.c.0.s8 %v2462
        %v2464 = vlaneseq
        %v2465 = vshrl.u32 %v2464, 7
        %v2466 = vsub.s32 %v2463, %v2465
        %v2467 = vrot.slane %v2459, %v2466
        %v2469 = vunpack.c.l.s4 1934713408
        %v2470 = vunpack.c.0.s8 %v2469
        %v2471 = vlaneseq
        %v2472 = vshrl.u32 %v2471, 7
        %v2473 = vsub.s32 %v2470, %v2472
        %v2474 = vrot.slane %v2460, %v2473
        %v2475 = vcombine.low %v2410, %v2426
        %v2476 = vcombine.high %v2410, %v2426
        %v2478 = vunpack.c.l.s4 1934713408
        %v2479 = vunpack.c.0.s8 %v2478
        %v2480 = vlaneseq
        %v2481 = vshrl.u32 %v2480, 7
        %v2482 = vsub.s32 %v2479, %v2481
        %v2483 = vrot.slane %v2475, %v2482
        %v2485 = vunpack.c.l.s4 1934713408
        %v2486 = vunpack.c.0.s8 %v2485
        %v2487 = vlaneseq
        %v2488 = vshrl.u32 %v2487, 7
        %v2489 = vsub.s32 %v2486, %v2488
        %v2490 = vrot.slane %v2476, %v2489
        %v2491 = vcombine.low %v2435, %v2467
        %v2492 = vcombine.high %v2435, %v2467
        %v2493 = vcombine.low %v2442, %v2474
        %v2494 = vcombine.high %v2442, %v2474
        %v2495 = vcombine.low %v2451, %v2483
        %v2496 = vcombine.high %v2451, %v2483
        %v2497 = vcombine.low %v2458, %v2490
        %v2498 = vcombine.high %v2458, %v2490
        %v2499 = vcombine.low %v2491, %v2493
        %v2500 = vcombine.high %v2491, %v2493
        %v2502 = vunpack.c.l.s4 1983009808
        %v2503 = vunpack.c.0.s8 %v2502
        %v2504 = vlaneseq
        %v2505 = vshrl.u32 %v2504, 7
        %v2506 = vsub.s32 %v2503, %v2505
        %v2507 = vrot.slane %v2499, %v2506
        %v2509 = vunpack.c.l.s4 1983009808
        %v2510 = vunpack.c.0.s8 %v2509
        %v2511 = vlaneseq
        %v2512 = vshrl.u32 %v2511, 7
        %v2513 = vsub.s32 %v2510, %v2512
        %v2514 = vrot.slane %v2500, %v2513
        %v2515 = vcombine.low %v2492, %v2494
        %v2516 = vcombine.high %v2492, %v2494
        %v2518 = vunpack.c.l.s4 1983009808
        %v2519 = vunpack.c.0.s8 %v2518
        %v2520 = vlaneseq
        %v2521 = vshrl.u32 %v2520, 7
        %v2522 = vsub.s32 %v2519, %v2521
        %v2523 = vrot.slane %v2515, %v2522
        %v2525 = vunpack.c.l.s4 1983009808
        %v2526 = vunpack.c.0.s8 %v2525
        %v2527 = vlaneseq
        %v2528 = vshrl.u32 %v2527, 7
        %v2529 = vsub.s32 %v2526, %v2528
        %v2530 = vrot.slane %v2516, %v2529
        %v2531 = vcombine.low %v2495, %v2497
        %v2532 = vcombine.high %v2495, %v2497
        %v2534 = vunpack.c.l.s4 1983009808
        %v2535 = vunpack.c.0.s8 %v2534
        %v2536 = vlaneseq
        %v2537 = vshrl.u32 %v2536, 7
        %v2538 = vsub.s32 %v2535, %v2537
        %v2539 = vrot.slane %v2531, %v2538
        %v2541 = vunpack.c.l.s4 1983009808
        %v2542 = vunpack.c.0.s8 %v2541
        %v2543 = vlaneseq
        %v2544 = vshrl.u32 %v2543, 7
        %v2545 = vsub.s32 %v2542, %v2544
        %v2546 = vrot.slane %v2532, %v2545
        %v2547 = vcombine.low %v2496, %v2498
        %v2548 = vcombine.high %v2496, %v2498
        %v2550 = vunpack.c.l.s4 1983009808
        %v2551 = vunpack.c.0.s8 %v2550
        %v2552 = vlaneseq
        %v2553 = vshrl.u32 %v2552, 7
        %v2554 = vsub.s32 %v2551, %v2553
        %v2555 = vrot.slane %v2547, %v2554
        %v2557 = vunpack.c.l.s4 1983009808
        %v2558 = vunpack.c.0.s8 %v2557
        %v2559 = vlaneseq
        %v2560 = vshrl.u32 %v2559, 7
        %v2561 = vsub.s32 %v2558, %v2560
        %v2562 = vrot.slane %v2548, %v2561
        %v2563 = vcombine.low %v2507, %v2523
        %v2564 = vcombine.high %v2507, %v2523
        %v2566 = vunpack.c.l.s4 1934713408
        %v2567 = vunpack.c.0.s8 %v2566
        %v2568 = vlaneseq
        %v2569 = vshrl.u32 %v2568, 7
        %v2570 = vsub.s32 %v2567, %v2569
        %v2571 = vrot.slane %v2563, %v2570
        %v2573 = vunpack.c.l.s4 1934713408
        %v2574 = vunpack.c.0.s8 %v2573
        %v2575 = vlaneseq
        %v2576 = vshrl.u32 %v2575, 7
        %v2577 = vsub.s32 %v2574, %v2576
        %v2578 = vrot.slane %v2564, %v2577
        %v2579 = vcombine.low %v2514, %v2530
        %v2580 = vcombine.high %v2514, %v2530
        %v2582 = vunpack.c.l.s4 1934713408
        %v2583 = vunpack.c.0.s8 %v2582
        %v2584 = vlaneseq
        %v2585 = vshrl.u32 %v2584, 7
        %v2586 = vsub.s32 %v2583, %v2585
        %v2587 = vrot.slane %v2579, %v2586
        %v2589 = vunpack.c.l.s4 1934713408
        %v2590 = vunpack.c.0.s8 %v2589
        %v2591 = vlaneseq
        %v2592 = vshrl.u32 %v2591, 7
        %v2593 = vsub.s32 %v2590, %v2592
        %v2594 = vrot.slane %v2580, %v2593
        %v2595 = vcombine.low %v2539, %v2555
        %v2596 = vcombine.high %v2539, %v2555
        %v2598 = vunpack.c.l.s4 1934713408
        %v2599 = vunpack.c.0.s8 %v2598
        %v2600 = vlaneseq
        %v2601 = vshrl.u32 %v2600, 7
        %v2602 = vsub.s32 %v2599, %v2601
        %v2603 = vrot.slane %v2595, %v2602
        %v2605 = vunpack.c.l.s4 1934713408
        %v2606 = vunpack.c.0.s8 %v2605
        %v2607 = vlaneseq
        %v2608 = vshrl.u32 %v2607, 7
        %v2609 = vsub.s32 %v2606, %v2608
        %v2610 = vrot.slane %v2596, %v2609
        %v2611 = vcombine.low %v2546, %v2562
        %v2612 = vcombine.high %v2546, %v2562
        %v2614 = vunpack.c.l.s4 1934713408
        %v2615 = vunpack.c.0.s8 %v2614
        %v2616 = vlaneseq
        %v2617 = vshrl.u32 %v2616, 7
        %v2618 = vsub.s32 %v2615, %v2617
        %v2619 = vrot.slane %v2611, %v2618
        %v2621 = vunpack.c.l.s4 1934713408
        %v2622 = vunpack.c.0.s8 %v2621
        %v2623 = vlaneseq
        %v2624 = vshrl.u32 %v2623, 7
        %v2625 = vsub.s32 %v2622, %v2624
        %v2626 = vrot.slane %v2612, %v2625
        %v2627 = vcombine.low %v2571, %v2603
        %v2628 = vcombine.high %v2571, %v2603
        %v2629 = vcombine.low %v2578, %v2610
        %v2630 = vcombine.high %v2578, %v2610
        %v2631 = vcombine.low %v2587, %v2619
        %v2632 = vcombine.high %v2587, %v2619
        %v2633 = vcombine.low %v2594, %v2626
        %v2634 = vcombine.high %v2594, %v2626
        %2636 = vrot.lane.b32.xlu0 %v2628, 16
        %v2637 = vpop.permute.xlu0 %2636
        %2640 = vrot.lane.b32.xlu0 %v2629, 32
        %v2641 = vpop.permute.xlu0 %2640
        %2644 = vrot.lane.b32.xlu0 %v2630, 48
        %v2645 = vpop.permute.xlu0 %2644
        %2648 = vrot.lane.b32.xlu0 %v2631, 64
        %v2649 = vpop.permute.xlu0 %2648
        %2652 = vrot.lane.b32.xlu0 %v2632, 80
        %v2653 = vpop.permute.xlu0 %2652
        %2656 = vrot.lane.b32.xlu0 %v2633, 96
        %v2657 = vpop.permute.xlu0 %2656
        %2660 = vrot.lane.b32.xlu0 %v2634, 112
        %v2661 = vpop.permute.xlu0 %2660
        %v2663 = vsel %vm1520, %v2627, %v2637
        %vm2664 = vcmask 261120
        %v2665 = vsel %vm2664, %v2663, %v2641
        %vm2666 = vcmask 392192
        %v2667 = vsel %vm2666, %v2665, %v2645
        %vm2668 = vcmask 523264
        %v2669 = vsel %vm2668, %v2667, %v2649
        %vm2670 = vcmask 654336
        %v2671 = vsel %vm2670, %v2669, %v2653
        %vm2672 = vcmask 785408
        %v2673 = vsel %vm2672, %v2671, %v2657
        %vm2674 = vcmask 916480
        %v2675 = vsel %vm2674, %v2673, %v2661
        %v2676 = vpack.c.bf16 %v2675, %v2675
        %v2677 = vld [vmem:[#allocation7] sm:$0xf]
        %v2678 = vld [vmem:[#allocation7 + $0x4] sm:$0xf]
        %v2679 = vld [vmem:[#allocation7 + $0x8] sm:$0xf]
        %v2680 = vld [vmem:[#allocation7 + $0xc] sm:$0xf]
        %v2681 = vld [vmem:[#allocation7 + $0x10] sm:$0xf]
        %v2682 = vld [vmem:[#allocation7 + $0x14] sm:$0xf]
        %v2683 = vld [vmem:[#allocation7 + $0x18] sm:$0xf]
        %v2684 = vld [vmem:[#allocation7 + $0x1c] sm:$0xf]
        %v2685 = vld [vmem:[#allocation7 + $0x20] sm:$0xf]
        %v2686 = vld [vmem:[#allocation7 + $0x24] sm:$0xf]
        %v2687 = vld [vmem:[#allocation7 + $0x28] sm:$0xf]
        %v2688 = vld [vmem:[#allocation7 + $0x2c] sm:$0xf]
        %v2689 = vld [vmem:[#allocation7 + $0x30] sm:$0xf]
        %v2690 = vld [vmem:[#allocation7 + $0x34] sm:$0xf]
        %v2691 = vld [vmem:[#allocation7 + $0x38] sm:$0xf]
        %v2692 = vld [vmem:[#allocation7 + $0x3c] sm:$0xf]
        %v2693 = vld [vmem:[%s5 + $0x3] sm:$0x1]
        %v2694 = vlaneseq
        %v2695 = vshrl.u32 %v2694, 7
        %v2696 = vsub.s32 0, %v2695
        %v2697 = vrot.slane %v2693, %v2696
        %v2714 = vunpack.c.l.b16 %v2677
        %v2715 = vunpack.c.l.b16 %v2678
        %v2716 = vunpack.c.l.b16 %v2679
        %v2717 = vunpack.c.l.b16 %v2680
        %v2718 = vunpack.c.l.b16 %v2681
        %v2719 = vunpack.c.l.b16 %v2682
        %v2720 = vunpack.c.l.b16 %v2683
        %v2721 = vunpack.c.l.b16 %v2684
        %v2722 = vunpack.c.l.b16 %v2685
        %v2723 = vunpack.c.l.b16 %v2686
        %v2724 = vunpack.c.l.b16 %v2687
        %v2725 = vunpack.c.l.b16 %v2688
        %v2726 = vunpack.c.l.b16 %v2689
        %v2727 = vunpack.c.l.b16 %v2690
        %v2728 = vunpack.c.l.b16 %v2691
        %v2729 = vunpack.c.l.b16 %v2692
        %v2730 = vpack.c.b16 %v2715, %v2714
        %v2731 = vpack.c.b16 %v2717, %v2716
        %v2732 = vpack.c.b16 %v2719, %v2718
        %v2733 = vpack.c.b16 %v2721, %v2720
        %v2734 = vpack.c.b16 %v2723, %v2722
        %v2735 = vpack.c.b16 %v2725, %v2724
        %v2736 = vpack.c.b16 %v2727, %v2726
        %v2737 = vpack.c.b16 %v2729, %v2728
        %2746 = vmatprep.subr.bf16.mxu0 0
        %2747 = vmatpush1.bf16.msra.mxu0 %v2730
        %2748 = vmatprep.subr.bf16.mxu0 0
        %2749 = vmatpush1.bf16.msra.mxu0 %v2731
        %2750 = vmatprep.subr.bf16.mxu0 0
        %2751 = vmatpush1.bf16.msra.mxu0 %v2732
        %2752 = vmatprep.subr.bf16.mxu0 0
        %2753 = vmatpush1.bf16.msra.mxu0 %v2733
        %2754 = vmatprep.subr.bf16.mxu0 0
        %2755 = vmatpush1.bf16.msra.mxu0 %v2734
        %2756 = vmatprep.subr.bf16.mxu0 0
        %2757 = vmatpush1.bf16.msra.mxu0 %v2735
        %2758 = vmatprep.subr.bf16.mxu0 0
        %2759 = vmatpush1.bf16.msra.mxu0 %v2736
        %2760 = vmatprep.subr.bf16.mxu0 0
        %2761 = vmatpush1.bf16.msra.mxu0 %v2737
        %2762 = vmatprep.subr.bf16.mxu0 0
        %2763 = vmatpush1.bf16.msra.mxu0 0
        %2764 = vmatprep.subr.bf16.mxu0 0
        %2765 = vmatpush1.bf16.msra.mxu0 0
        %2766 = vmatprep.subr.bf16.mxu0 0
        %2767 = vmatpush1.bf16.msra.mxu0 0
        %2768 = vmatprep.subr.bf16.mxu0 0
        %2769 = vmatpush1.bf16.msra.mxu0 0
        %2770 = vmatprep.subr.bf16.mxu0 0
        %2771 = vmatpush1.bf16.msra.mxu0 0
        %2772 = vmatprep.subr.bf16.mxu0 0
        %2773 = vmatpush1.bf16.msra.mxu0 0
        %2774 = vmatprep.subr.bf16.mxu0 0
        %2775 = vmatpush1.bf16.msra.mxu0 0
        %2776 = vmatprep.subr.bf16.mxu0 0
        %2777 = vmatpush1.bf16.msra.mxu0 0
        %2778 = vmatprep.mubr.bf16.mxu0 0
        %2779 = vmatmul.mubr.bf16.gmra.mrb[0].mxu0 %v2676
        %v2780 = vpop.f32.mrb[0].mxu0
        %v2781 = vadd.f32 %v2697, %v2780
        %v2782 = vpop.f32.mrb[0].mxu0
        %v2783 = vpop.f32.mrb[0].mxu0
        %v2784 = vpop.f32.mrb[0].mxu0
        %2785 = vdwg.mxu0
        %v2786 = vadd.f32 %v353, %v2781
        %v2787 = vld [vmem:[%s5 + $0x5] sm:$0x1]
        %v2788 = vld [vmem:[%s5 + $0x6] sm:$0x1]
        %2789 = vadd.xlane.f32.xlu0 %v2786
        %v2790 = vpop.xlane.xlu0 %2789
        %v2791 = vrcp.pop 128.0
        %v2792 = vmul.f32 %v2790, %v2791
        %v2793 = vsub.f32 %v2786, %v2792
        %v2794 = vmul.f32 %v2793, %v2793
        %2795 = vadd.xlane.f32.xlu0 %v2794
        %v2796 = vpop.xlane.xlu0 %2795
        %v2797 = vmul.f32 %v2796, %v2791
        %v2798 = vadd.f32 %v2797, 1e-05
        %v2799 = vrsqrt.pop %v2798
        %v2800 = vmul.f32 %v2793, %v2799
        %v2801 = vlaneseq
        %v2802 = vshrl.u32 %v2801, 7
        %v2803 = vsub.s32 0, %v2802
        %v2804 = vrot.slane %v2787, %v2803
        %v2805 = vmul.f32 %v2800, %v2804
        %v2806 = vlaneseq
        %v2807 = vshrl.u32 %v2806, 7
        %v2808 = vsub.s32 0, %v2807
        %v2809 = vrot.slane %v2788, %v2808
        %v2810 = vadd.f32 %v2805, %v2809
        %v2811 = vpack.c.bf16 %v2810, %v2810
        %v2812 = vld [vmem:[#allocation8] sm:$0xff]
        %v2813 = vld [vmem:[#allocation8 + $0x8] sm:$0xff]
        %v2814 = vld [vmem:[#allocation8 + $0x10] sm:$0xff]
        %v2815 = vld [vmem:[#allocation8 + $0x18] sm:$0xff]
        %v2816 = vld [vmem:[#allocation8 + $0x20] sm:$0xff]
        %v2817 = vld [vmem:[#allocation8 + $0x28] sm:$0xff]
        %v2818 = vld [vmem:[#allocation8 + $0x30] sm:$0xff]
        %v2819 = vld [vmem:[#allocation8 + $0x38] sm:$0xff]
        %v2820 = vld [vmem:[#allocation8 + $0x40] sm:$0xff]
        %v2821 = vld [vmem:[#allocation8 + $0x48] sm:$0xff]
        %v2822 = vld [vmem:[#allocation8 + $0x50] sm:$0xff]
        %v2823 = vld [vmem:[#allocation8 + $0x58] sm:$0xff]
        %v2824 = vld [vmem:[#allocation8 + $0x60] sm:$0xff]
        %v2825 = vld [vmem:[#allocation8 + $0x68] sm:$0xff]
        %v2826 = vld [vmem:[#allocation8 + $0x70] sm:$0xff]
        %v2827 = vld [vmem:[#allocation8 + $0x78] sm:$0xff]
        %v2828 = vld [vmem:[%s6] sm:$0x3]
        %v2830 = vlaneseq
        %v2831 = vshrl.u32 %v2830, 7
        %v2832 = vsub.s32 0, %v2831
        %v2833 = vrot.slane %v2828, %v2832
        %v2834 = vlaneseq
        %v2835 = vshrl.u32 %v2834, 7
        %v2836 = vsub.s32 1, %v2835
        %v2837 = vrot.slane %v2828, %v2836
        %v2856 = vunpack.c.l.b16 %v2812
        %v2857 = vunpack.c.h.b16 %v2812
        %v2858 = vunpack.c.l.b16 %v2813
        %v2859 = vunpack.c.h.b16 %v2813
        %v2860 = vunpack.c.l.b16 %v2814
        %v2861 = vunpack.c.h.b16 %v2814
        %v2862 = vunpack.c.l.b16 %v2815
        %v2863 = vunpack.c.h.b16 %v2815
        %v2864 = vunpack.c.l.b16 %v2816
        %v2865 = vunpack.c.h.b16 %v2816
        %v2866 = vunpack.c.l.b16 %v2817
        %v2867 = vunpack.c.h.b16 %v2817
        %v2868 = vunpack.c.l.b16 %v2818
        %v2869 = vunpack.c.h.b16 %v2818
        %v2870 = vunpack.c.l.b16 %v2819
        %v2871 = vunpack.c.h.b16 %v2819
        %v2872 = vunpack.c.l.b16 %v2820
        %v2873 = vunpack.c.h.b16 %v2820
        %v2874 = vunpack.c.l.b16 %v2821
        %v2875 = vunpack.c.h.b16 %v2821
        %v2876 = vunpack.c.l.b16 %v2822
        %v2877 = vunpack.c.h.b16 %v2822
        %v2878 = vunpack.c.l.b16 %v2823
        %v2879 = vunpack.c.h.b16 %v2823
        %v2880 = vunpack.c.l.b16 %v2824
        %v2881 = vunpack.c.h.b16 %v2824
        %v2882 = vunpack.c.l.b16 %v2825
        %v2883 = vunpack.c.h.b16 %v2825
        %v2884 = vunpack.c.l.b16 %v2826
        %v2885 = vunpack.c.h.b16 %v2826
        %v2886 = vunpack.c.l.b16 %v2827
        %v2887 = vunpack.c.h.b16 %v2827
        %v2888 = vpack.c.b16 %v2858, %v2856
        %v2889 = vpack.c.b16 %v2859, %v2857
        %v2890 = vpack.c.b16 %v2862, %v2860
        %v2891 = vpack.c.b16 %v2863, %v2861
        %v2892 = vpack.c.b16 %v2866, %v2864
        %v2893 = vpack.c.b16 %v2867, %v2865
        %v2894 = vpack.c.b16 %v2870, %v2868
        %v2895 = vpack.c.b16 %v2871, %v2869
        %v2896 = vpack.c.b16 %v2874, %v2872
        %v2897 = vpack.c.b16 %v2875, %v2873
        %v2898 = vpack.c.b16 %v2878, %v2876
        %v2899 = vpack.c.b16 %v2879, %v2877
        %v2900 = vpack.c.b16 %v2882, %v2880
        %v2901 = vpack.c.b16 %v2883, %v2881
        %v2902 = vpack.c.b16 %v2886, %v2884
        %v2903 = vpack.c.b16 %v2887, %v2885
        %2920 = vmatprep.subr.bf16.mxu0 %v2889
        %2921 = vmatpush1.bf16.msra.mxu0 %v2888
        %2922 = vmatprep.subr.bf16.mxu0 %v2891
        %2923 = vmatpush1.bf16.msra.mxu0 %v2890
        %2924 = vmatprep.subr.bf16.mxu0 %v2893
        %2925 = vmatpush1.bf16.msra.mxu0 %v2892
        %2926 = vmatprep.subr.bf16.mxu0 %v2895
        %2927 = vmatpush1.bf16.msra.mxu0 %v2894
        %2928 = vmatprep.subr.bf16.mxu0 %v2897
        %2929 = vmatpush1.bf16.msra.mxu0 %v2896
        %2930 = vmatprep.subr.bf16.mxu0 %v2899
        %2931 = vmatpush1.bf16.msra.mxu0 %v2898
        %2932 = vmatprep.subr.bf16.mxu0 %v2901
        %2933 = vmatpush1.bf16.msra.mxu0 %v2900
        %2934 = vmatprep.subr.bf16.mxu0 %v2903
        %2935 = vmatpush1.bf16.msra.mxu0 %v2902
        %2936 = vmatprep.subr.bf16.mxu0 0
        %2937 = vmatpush1.bf16.msra.mxu0 0
        %2938 = vmatprep.subr.bf16.mxu0 0
        %2939 = vmatpush1.bf16.msra.mxu0 0
        %2940 = vmatprep.subr.bf16.mxu0 0
        %2941 = vmatpush1.bf16.msra.mxu0 0
        %2942 = vmatprep.subr.bf16.mxu0 0
        %2943 = vmatpush1.bf16.msra.mxu0 0
        %2944 = vmatprep.subr.bf16.mxu0 0
        %2945 = vmatpush1.bf16.msra.mxu0 0
        %2946 = vmatprep.subr.bf16.mxu0 0
        %2947 = vmatpush1.bf16.msra.mxu0 0
        %2948 = vmatprep.subr.bf16.mxu0 0
        %2949 = vmatpush1.bf16.msra.mxu0 0
        %2950 = vmatprep.subr.bf16.mxu0 0
        %2951 = vmatpush1.bf16.msra.mxu0 0
        %2952 = vmatprep.mubr.bf16.mxu0 0
        %2953 = vmatmul.mubr.bf16.gmra.mrb[0].mxu0 %v2811
        %v2954 = vpop.f32.mrb[0].mxu0
        %v2955 = vadd.f32 %v2833, %v2954
        %v2956 = vpop.f32.mrb[0].mxu0
        %v2957 = vadd.f32 %v2837, %v2956
        %v2958 = vpop.f32.mrb[0].mxu0
        %v2959 = vpop.f32.mrb[0].mxu0
        %2960 = vdwg.mxu0
        %v2961 = vmax.f32 %v2955, 0.0
        %v2962 = vmax.f32 %v2957, 0.0
        %v2963 = vpack.c.bf16 %v2961, %v2961
        %v2964 = vpack.c.bf16 %v2962, %v2962
        %v2965 = vld [vmem:[#allocation10] sm:$0xf]
        %v2966 = vld [vmem:[#allocation10 + $0x4] sm:$0xf]
        %v2967 = vld [vmem:[#allocation10 + $0x8] sm:$0xf]
        %v2968 = vld [vmem:[#allocation10 + $0xc] sm:$0xf]
        %v2969 = vld [vmem:[#allocation10 + $0x10] sm:$0xf]
        %v2970 = vld [vmem:[#allocation10 + $0x14] sm:$0xf]
        %v2971 = vld [vmem:[#allocation10 + $0x18] sm:$0xf]
        %v2972 = vld [vmem:[#allocation10 + $0x1c] sm:$0xf]
        %v2973 = vld [vmem:[#allocation10 + $0x20] sm:$0xf]
        %v2974 = vld [vmem:[#allocation10 + $0x24] sm:$0xf]
        %v2975 = vld [vmem:[#allocation10 + $0x28] sm:$0xf]
        %v2976 = vld [vmem:[#allocation10 + $0x2c] sm:$0xf]
        %v2977 = vld [vmem:[#allocation10 + $0x30] sm:$0xf]
        %v2978 = vld [vmem:[#allocation10 + $0x34] sm:$0xf]
        %v2979 = vld [vmem:[#allocation10 + $0x38] sm:$0xf]
        %v2980 = vld [vmem:[#allocation10 + $0x3c] sm:$0xf]
        %v2981 = vld [vmem:[#allocation10 + $0x40] sm:$0xf]
        %v2982 = vld [vmem:[#allocation10 + $0x44] sm:$0xf]
        %v2983 = vld [vmem:[#allocation10 + $0x48] sm:$0xf]
        %v2984 = vld [vmem:[#allocation10 + $0x4c] sm:$0xf]
        %v2985 = vld [vmem:[#allocation10 + $0x50] sm:$0xf]
        %v2986 = vld [vmem:[#allocation10 + $0x54] sm:$0xf]
        %v2987 = vld [vmem:[#allocation10 + $0x58] sm:$0xf]
        %v2988 = vld [vmem:[#allocation10 + $0x5c] sm:$0xf]
        %v2989 = vld [vmem:[#allocation10 + $0x60] sm:$0xf]
        %v2990 = vld [vmem:[#allocation10 + $0x64] sm:$0xf]
        %v2991 = vld [vmem:[#allocation10 + $0x68] sm:$0xf]
        %v2992 = vld [vmem:[#allocation10 + $0x6c] sm:$0xf]
        %v2993 = vld [vmem:[#allocation10 + $0x70] sm:$0xf]
        %v2994 = vld [vmem:[#allocation10 + $0x74] sm:$0xf]
        %v2995 = vld [vmem:[#allocation10 + $0x78] sm:$0xf]
        %v2996 = vld [vmem:[#allocation10 + $0x7c] sm:$0xf]
        %v2997 = vld [vmem:[%s5 + $0x4] sm:$0x1]
        %v2998 = vlaneseq
        %v2999 = vshrl.u32 %v2998, 7
        %v3000 = vsub.s32 0, %v2999
        %v3001 = vrot.slane %v2997, %v3000
        %v3034 = vunpack.c.l.b16 %v2965
        %v3035 = vunpack.c.l.b16 %v2966
        %v3036 = vunpack.c.l.b16 %v2967
        %v3037 = vunpack.c.l.b16 %v2968
        %v3038 = vunpack.c.l.b16 %v2969
        %v3039 = vunpack.c.l.b16 %v2970
        %v3040 = vunpack.c.l.b16 %v2971
        %v3041 = vunpack.c.l.b16 %v2972
        %v3042 = vunpack.c.l.b16 %v2973
        %v3043 = vunpack.c.l.b16 %v2974
        %v3044 = vunpack.c.l.b16 %v2975
        %v3045 = vunpack.c.l.b16 %v2976
        %v3046 = vunpack.c.l.b16 %v2977
        %v3047 = vunpack.c.l.b16 %v2978
        %v3048 = vunpack.c.l.b16 %v2979
        %v3049 = vunpack.c.l.b16 %v2980
        %v3050 = vunpack.c.l.b16 %v2981
        %v3051 = vunpack.c.l.b16 %v2982
        %v3052 = vunpack.c.l.b16 %v2983
        %v3053 = vunpack.c.l.b16 %v2984
        %v3054 = vunpack.c.l.b16 %v2985
        %v3055 = vunpack.c.l.b16 %v2986
        %v3056 = vunpack.c.l.b16 %v2987
        %v3057 = vunpack.c.l.b16 %v2988
        %v3058 = vunpack.c.l.b16 %v2989
        %v3059 = vunpack.c.l.b16 %v2990
        %v3060 = vunpack.c.l.b16 %v2991
        %v3061 = vunpack.c.l.b16 %v2992
        %v3062 = vunpack.c.l.b16 %v2993
        %v3063 = vunpack.c.l.b16 %v2994
        %v3064 = vunpack.c.l.b16 %v2995
        %v3065 = vunpack.c.l.b16 %v2996
        %v3066 = vpack.c.b16 %v3035, %v3034
        %v3067 = vpack.c.b16 %v3037, %v3036
        %v3068 = vpack.c.b16 %v3039, %v3038
        %v3069 = vpack.c.b16 %v3041, %v3040
        %v3070 = vpack.c.b16 %v3043, %v3042
        %v3071 = vpack.c.b16 %v3045, %v3044
        %v3072 = vpack.c.b16 %v3047, %v3046
        %v3073 = vpack.c.b16 %v3049, %v3048
        %v3074 = vpack.c.b16 %v3051, %v3050
        %v3075 = vpack.c.b16 %v3053, %v3052
        %v3076 = vpack.c.b16 %v3055, %v3054
        %v3077 = vpack.c.b16 %v3057, %v3056
        %v3078 = vpack.c.b16 %v3059, %v3058
        %v3079 = vpack.c.b16 %v3061, %v3060
        %v3080 = vpack.c.b16 %v3063, %v3062
        %v3081 = vpack.c.b16 %v3065, %v3064
        %3098 = vmatprep.subr.bf16.mxu0 0
        %3099 = vmatpush1.bf16.msra.mxu0 %v3066
        %3100 = vmatprep.subr.bf16.mxu0 0
        %3101 = vmatpush1.bf16.msra.mxu0 %v3067
        %3102 = vmatprep.subr.bf16.mxu0 0
        %3103 = vmatpush1.bf16.msra.mxu0 %v3068
        %3104 = vmatprep.subr.bf16.mxu0 0
        %3105 = vmatpush1.bf16.msra.mxu0 %v3069
        %3106 = vmatprep.subr.bf16.mxu0 0
        %3107 = vmatpush1.bf16.msra.mxu0 %v3070
        %3108 = vmatprep.subr.bf16.mxu0 0
        %3109 = vmatpush1.bf16.msra.mxu0 %v3071
        %3110 = vmatprep.subr.bf16.mxu0 0
        %3111 = vmatpush1.bf16.msra.mxu0 %v3072
        %3112 = vmatprep.subr.bf16.mxu0 0
        %3113 = vmatpush1.bf16.msra.mxu0 %v3073
        %3114 = vmatprep.subr.bf16.mxu0 0
        %3115 = vmatpush1.bf16.msra.mxu0 %v3074
        %3116 = vmatprep.subr.bf16.mxu0 0
        %3117 = vmatpush1.bf16.msra.mxu0 %v3075
        %3118 = vmatprep.subr.bf16.mxu0 0
        %3119 = vmatpush1.bf16.msra.mxu0 %v3076
        %3120 = vmatprep.subr.bf16.mxu0 0
        %3121 = vmatpush1.bf16.msra.mxu0 %v3077
        %3122 = vmatprep.subr.bf16.mxu0 0
        %3123 = vmatpush1.bf16.msra.mxu0 %v3078
        %3124 = vmatprep.subr.bf16.mxu0 0
        %3125 = vmatpush1.bf16.msra.mxu0 %v3079
        %3126 = vmatprep.subr.bf16.mxu0 0
        %3127 = vmatpush1.bf16.msra.mxu0 %v3080
        %3128 = vmatprep.subr.bf16.mxu0 0
        %3129 = vmatpush1.bf16.msra.mxu0 %v3081
        %3130 = vmatprep.mubr.bf16.mxu0 %v2964
        %3131 = vmatmul.mubr.bf16.gmra.mrb[0].mxu0 %v2963
        %v3132 = vpop.f32.mrb[0].mxu0
        %v3133 = vadd.f32 %v3001, %v3132
        %v3134 = vpop.f32.mrb[0].mxu0
        %v3135 = vpop.f32.mrb[0].mxu0
        %v3136 = vpop.f32.mrb[0].mxu0
        %3137 = vdwg.mxu0
        %v3138 = vadd.f32 %v2810, %v3133
        %v3139 = vld [vmem:[%s5 + $0x7] sm:$0x1]
        %v3140 = vld [vmem:[%s5 + $0x8] sm:$0x1]
        %3141 = vadd.xlane.f32.xlu0 %v3138
        %v3142 = vpop.xlane.xlu0 %3141
        %v3143 = vmul.f32 %v3142, %v2791
        %v3144 = vsub.f32 %v3138, %v3143
        %v3145 = vmul.f32 %v3144, %v3144
        %3146 = vadd.xlane.f32.xlu0 %v3145
        %v3147 = vpop.xlane.xlu0 %3146
        %v3148 = vmul.f32 %v3147, %v2791
        %v3149 = vadd.f32 %v3148, 1e-05
        %v3150 = vrsqrt.pop %v3149
        %v3151 = vmul.f32 %v3144, %v3150
        %v3152 = vlaneseq
        %v3153 = vshrl.u32 %v3152, 7
        %v3154 = vsub.s32 0, %v3153
        %v3155 = vrot.slane %v3139, %v3154
        %v3156 = vmul.f32 %v3151, %v3155
        %v3157 = vlaneseq
        %v3158 = vshrl.u32 %v3157, 7
        %v3159 = vsub.s32 0, %v3158
        %v3160 = vrot.slane %v3140, %v3159
        %v3161 = vadd.f32 %v3156, %v3160
        %3162 = vst [vmem:[%s351] sm:$0xff] %v3161
        %s3163 = sand.u32 %s186, 1
        %s3164 = scalar_lea.sflag [#allocation4], %s3163
        %s3165 = sand.u32 %s186, 1
        %s3166 = smul.addr %s3165, 8
        %s3167 = scalar_lea.vmem [#allocation11], %s3166
        // Predicated region
        $region69: #{tpu_custom_call.1} parent=47 // pred_check
          %p3168 = pneg %p196
        $region70: #{tpu_custom_call.1} parent=47 // pred_check_branch
          %3170 = sbr.rel (%p3168) target = $region72
        $region71: #{tpu_custom_call.1} parent=47 // pred_region
          %s3172 = ssub.s32 128, 128
          %3173 = vsyncadd %s3164, %s3172
          %s3174 = smul.addr %s26, 128
          %s3175 = scalar_lea.hbm %s7, %s3174
          %s3177 = sshll.u32 %s3167, 4
          %s3178 = int_to_ptr.vmem [resolvable:$true] %s3177
          %3180 = dma.vmem_to_hbm [thread:$0]  %s3178, 128, %s3175, %s3164
        $region72: #{tpu_custom_call.1} parent=47 // pred_fallthru
          _
      $region48: #{tpu_custom_call.1} parent=5 // pred_fallthru
        _
      %p3181 = scmp.le.s32.totalorder 2, %s21
      // Predicated region
      $region73: #{tpu_custom_call.1} parent=5 // pred_check
        %p3182 = pneg %p3181
      $region74: #{tpu_custom_call.1} parent=5 // pred_check_branch
        %3184 = sbr.rel (%p3182) target = $region76
      $region75: #{tpu_custom_call.1} parent=5 // pred_region
        %s3185 = ssub.s32 %s21, 2
        // Predicated region
        $region77: #{tpu_custom_call.1} parent=75 // pred_check
          %p3186 = pneg %p202
        $region78: #{tpu_custom_call.1} parent=75 // pred_check_branch
          %3188 = sbr.rel (%p3186) target = $region80
        $region79: #{tpu_custom_call.1} parent=75 // pred_region
          %s3189 = sand.u32 %s187, 1
          %s3190 = scalar_lea.sflag [#allocation4], %s3189
          %s3191 = sand.u32 %s187, 1
          %s3192 = smul.addr %s3191, 8
          %s3193 = scalar_lea.vmem [#allocation11], %s3192
          %3194 = dma.done %s3190, 128
        $region80: #{tpu_custom_call.1} parent=75 // pred_fallthru
          _
      $region76: #{tpu_custom_call.1} parent=5 // pred_fallthru
        _
    $region6: #{tpu_custom_call.1} parent=1 // loop_footer
      %s25 = sadd.s32 1, %s21
    $region7: #{tpu_custom_call.1} parent=1 // loop_footer_branch
      %20 = sbr.rel target = $region3
    $region8: #{tpu_custom_call.1} parent=1 // loop_exit
      _
    %3195 = vsyncpa [#allocation3], 1
    %s3196 = scalar_lea.sflag [#allocation3], 1
    %3197 = vsyncpa %s3196, 1
    %3198 = vsyncpa [#allocation6], 1
    %3199 = vsyncpa [#allocation9], 1
    %3200 = vsyncpa [#allocation4], 1
    %s3201 = scalar_lea.sflag [#allocation4], 1
    %3202 = vsyncpa %s3201, 1

</llo_original>
